<compile_context>
chip_gen: v7x
topology: tpu7x:2x2x1
jax: 0.10.0
libtpu: 0.0.40
codegen_flags: <defaults>
</compile_context>

<pallas_src>
import functools

import jax
import jax.numpy as jnp
from jax.experimental import pallas as pl
from jax.experimental.pallas import tpu as pltpu


def _conv3x3_rowband_kernel(mask_ref, x_ref, halo_ref, w_ref, b_ref, o_ref,
                            xpad_ref):
    """One (batch, row-tile) block per grid step.

    mask_ref: (2, TH*W)            f32 edge masks: row0 = left-valid, row1 = right-valid
    x_ref:    (1, Cin, TH*W)       flat row band of the input (no halo)
    halo_ref: (1, 1, 2, Cin, W)    [0] = image row above the band, [1] = row below
    w_ref:    (9, Cout, Cin)       conv weight per (ky, kx) tap
    b_ref:    (Cout, 1)            conv bias (f32)
    o_ref:    (1, Cout, TH*W)      lane-dense conv output band
    xpad_ref: (Cin, TH*W + 2W + 2) VMEM scratch: vertically padded flat band
    """
    W = halo_ref.shape[-1]
    P = x_ref.shape[-1]
    cin = xpad_ref.shape[0]

    # --- assemble the vertically padded flat row band in VMEM ----------------
    # layout: [guard(1) | row-above(W) | body(P) | row-below(W) | guard(1)]
    zguard = jnp.zeros((cin, 1), xpad_ref.dtype)
    xpad_ref[:, 0:1] = zguard                                    # left guard (kept finite)
    xpad_ref[:, 1:1 + W] = halo_ref[0, 0, 0]                     # halo row above
    xpad_ref[:, 1 + W:1 + W + P] = x_ref[0]                      # band body
    xpad_ref[:, 1 + W + P:1 + 2 * W + P] = halo_ref[0, 0, 1]     # halo row below
    xpad_ref[:, 1 + 2 * W + P:2 + 2 * W + P] = zguard            # right guard

    # --- 9 taps = static lane-offset slices; one small MXU matmul each -------
    # body pixel p lives at flat position 1+W+p; tap (ky,kx) reads position
    # p + (ky-1)*W + (kx-1)  ->  slice start ky*W + kx.
    acc_by_kx = []
    for kx in range(3):
        acc = None
        for ky in range(3):
            s = ky * W + kx
            tap = xpad_ref[:, s:s + P]                           # (Cin, P)
            part = jnp.dot(w_ref[3 * ky + kx], tap,
                           preferred_element_type=jnp.float32)   # (Cout, P)
            acc = part if acc is None else acc + part
        acc_by_kx.append(acc)

    # --- zero the contributions that crossed the left / right image edge -----
    acc = (acc_by_kx[1]
           + acc_by_kx[0] * mask_ref[0:1, :]
           + acc_by_kx[2] * mask_ref[1:2, :])
    acc = acc + b_ref[...]                                       # (Cout, 1) broadcast
    o_ref[...] = acc[None].astype(o_ref.dtype)


def _pick_tile_rows(H, W, cin, cout, in_itemsize, out_itemsize,
                    budget_bytes=16 * 1024 * 1024):
    """Largest row tile TH dividing H with TH*W lane-aligned (or TH == H) that
    keeps per-step VMEM (scratch + double-buffered blocks) under budget."""
    cands = [th for th in range(H, 0, -1)
             if H % th == 0 and (th == H or (th * W) % 128 == 0)]
    for th in cands:  # descending
        p = th * W
        est = (in_itemsize * (cin * (p + 2 * W + 2)      # xpad scratch
                              + 2 * cin * p              # double-buffered body
                              + 4 * cin * W)             # double-buffered halos
               + out_itemsize * 2 * cout * p)            # double-buffered output
        if est <= budget_bytes:
            return th
    return cands[-1]


@functools.partial(jax.jit, static_argnames=("scale", "tile_rows", "compute_dtype"))
def upsample_one_step(x_nchw, weight_oihw, bias, scale, tile_rows=None,
                      compute_dtype=None):
    """x: (N, Cin, H, W); weight: (Cout, Cin, 3, 3); bias: (Cout,).

    Returns (N, num_out_ch, H*scale, W*scale), matching PyTorch semantics.
    """
    N, Cin, H, W = x_nchw.shape
    Cout = weight_oihw.shape[0]                 # = scale**2 * num_out_ch
    r = scale
    num_out_ch = Cout // (r * r)

    cdtype = x_nchw.dtype if compute_dtype is None else jnp.dtype(compute_dtype)
    in_isz = jnp.dtype(cdtype).itemsize
    out_isz = jnp.dtype(x_nchw.dtype).itemsize
    TH = tile_rows if tile_rows is not None else _pick_tile_rows(
        H, W, Cin, Cout, in_isz, out_isz)
    assert H % TH == 0, (H, TH)
    assert TH == H or (TH * W) % 128 == 0, (TH, W)
    n_t = H // TH
    P = TH * W

    # Keep PyTorch's NCHW layout; flatten spatial (free, contiguous collapse).
    x_c = x_nchw.astype(cdtype)
    x_flat = x_c.reshape(N, Cin, H * W)

    # Tiny per-tile halo rows:
    #   halo[n, t, 0] = input row t*TH - 1   (zeros for the first tile)
    #   halo[n, t, 1] = input row (t+1)*TH   (zeros for the last tile)
    zrow = jnp.zeros((N, 1, Cin, W), cdtype)
    above = jnp.transpose(x_c[:, :, TH - 1:H - 1:TH, :], (0, 2, 1, 3))
    above = jnp.concatenate([zrow, above], axis=1)               # (N, n_t, Cin, W)
    below = jnp.transpose(x_c[:, :, TH:H:TH, :], (0, 2, 1, 3))
    below = jnp.concatenate([below, zrow], axis=1)               # (N, n_t, Cin, W)
    halo = jnp.stack([above, below], axis=2)                     # (N, n_t, 2, Cin, W)

    # Edge masks for the horizontal zero padding (same for every row tile).
    col = jnp.arange(P, dtype=jnp.int32) % W
    edge_mask = jnp.stack([(col != 0), (col != W - 1)]).astype(jnp.float32)  # (2, P)

    # (Cout, Cin, ky, kx) -> (9, Cout, Cin): tap idx = 3*ky + kx, matching the kernel.
    w9 = jnp.transpose(weight_oihw, (2, 3, 0, 1)).reshape(9, Cout, Cin).astype(cdtype)
    b2d = bias.reshape(Cout, 1).astype(jnp.float32)

    conv_flat = pl.pallas_call(
        _conv3x3_rowband_kernel,
        out_shape=jax.ShapeDtypeStruct((N, Cout, H * W), x_nchw.dtype),
        grid_spec=pltpu.PrefetchScalarGridSpec(
            num_scalar_prefetch=0,
            grid=(N, n_t),
            in_specs=[
                pl.BlockSpec((2, P), lambda n, t: (0, 0)),
                pl.BlockSpec((1, Cin, P), lambda n, t: (n, 0, t)),
                pl.BlockSpec((1, 1, 2, Cin, W), lambda n, t: (n, t, 0, 0, 0)),
                pl.BlockSpec((9, Cout, Cin), lambda n, t: (0, 0, 0)),
                pl.BlockSpec((Cout, 1), lambda n, t: (0, 0)),
            ],
            out_specs=pl.BlockSpec((1, Cout, P), lambda n, t: (n, 0, t)),
            scratch_shapes=[pltpu.VMEM((Cin, P + 2 * W + 2), cdtype)],
        ),
        compiler_params=pltpu.CompilerParams(
            dimension_semantics=("parallel", "parallel"),
            vmem_limit_bytes=48 * 1024 * 1024,
        ),
    )(edge_mask, x_flat, halo, w9, b2d)

    # PixelShuffle(scale): out[n, c, h*r+i, w*r+j] = conv[n, c*r*r + i*r + j, h, w]
    # TODO(synk): fuse the pixel shuffle into the kernel with r-strided lane
    # stores so this transpose does not re-read/re-write the conv output in HBM.
    y = conv_flat.reshape(N, num_out_ch, r, r, H, W)
    y = jnp.transpose(y, (0, 1, 4, 2, 5, 3))                     # (N, C, H, r, W, r)
    return y.reshape(N, num_out_ch, H * r, W * r)


def _reference(x_nchw, weight_oihw, bias, scale):
    """Pure-JAX reference (lax conv + pixel shuffle) for a correctness check."""
    conv = jax.lax.conv_general_dilated(
        x_nchw, weight_oihw, window_strides=(1, 1), padding=((1, 1), (1, 1)),
        dimension_numbers=("NCHW", "OIHW", "NCHW"),
        precision=jax.lax.Precision.HIGHEST,
    ) + bias.reshape(1, -1, 1, 1)
    N, C, H, W = conv.shape
    r = scale
    c_out = C // (r * r)
    y = conv.reshape(N, c_out, r, r, H, W)
    y = jnp.transpose(y, (0, 1, 4, 2, 5, 3))
    return y.reshape(N, c_out, H * r, W * r)


if __name__ == "__main__":
    # Module config (small, deterministic): scale=2, num_feat=16, num_out_ch=3.
    scale = 2
    num_feat = 16
    num_out_ch = 3
    N, H, W = 2, 16, 16
    Cout = scale * scale * num_out_ch

    key = jax.random.PRNGKey(0)
    k_x, k_w, k_b = jax.random.split(key, 3)
    x = jax.random.normal(k_x, (N, num_feat, H, W), dtype=jnp.float32)
    weight = jax.random.normal(k_w, (Cout, num_feat, 3, 3), dtype=jnp.float32) * 0.1
    bias = jax.random.normal(k_b, (Cout,), dtype=jnp.float32) * 0.1

    ref = _reference(x, weight, bias, scale)

    # Multi-row-tile path (grid=(2, 2)): exercises the halo rows.
    out = jax.block_until_ready(
        upsample_one_step(x, weight, bias, scale=scale, tile_rows=8))
    assert out.shape == (N, num_out_ch, H * scale, W * scale), out.shape
    assert jnp.allclose(out, ref, atol=2e-2, rtol=2e-2), "f32 (tiled) mismatch"

    # Auto tile selection (TH == H here -> single-tile path).
    out1 = jax.block_until_ready(upsample_one_step(x, weight, bias, scale=scale))
    assert jnp.allclose(out1, ref, atol=2e-2, rtol=2e-2), "f32 (single tile) mismatch"

    # bf16 compute path (halved HBM/DMA bytes, f32 accumulation), checked against
    # a reference run on bf16-quantized inputs.
    out_bf16 = jax.block_until_ready(
        upsample_one_step(x, weight, bias, scale=scale, tile_rows=8,
                          compute_dtype=jnp.bfloat16))
    xq = x.astype(jnp.bfloat16).astype(jnp.float32)
    wq = weight.astype(jnp.bfloat16).astype(jnp.float32)
    ref_bf16 = _reference(xq, wq, bias, scale)
    assert jnp.allclose(out_bf16, ref_bf16, atol=5e-2, rtol=5e-2), "bf16 mismatch"

    print("KERNEL_OK")
</pallas_src>

<mosaic_0001>
module attributes {stable_mosaic.version = 11 : i64} {
  func.func @_conv3x3_rowband_kernel(%arg0: i32, %arg1: i32, %arg2: memref<2x128xf32, #tpu.memory_space<vmem>>, %arg3: memref<1x16x128xf32, #tpu.memory_space<vmem>>, %arg4: memref<1x1x2x16x16xf32, #tpu.memory_space<vmem>>, %arg5: memref<9x12x16xf32, #tpu.memory_space<vmem>>, %arg6: memref<12x1xf32, #tpu.memory_space<vmem>>, %arg7: memref<1x12x128xf32, #tpu.memory_space<vmem>>, %arg8: memref<16x162xf32, #tpu.memory_space<vmem>>) attributes {dimension_semantics = [#tpu.dimension_semantics<parallel>, #tpu.dimension_semantics<parallel>], iteration_bounds = array<i64: 2, 2>, scalar_prefetch = 0 : i64, scratch_operands = 1 : i64, tpu.core_type = #tpu.core_type<tc>, window_params = [{pipeline_mode = #tpu.pipeline_mode<synchronous>, transform_indices = @transform_0, window_bounds = array<i64: 2, 128>}, {transform_indices = @transform_1, window_bounds = array<i64: 1, 16, 128>}, {transform_indices = @transform_2, window_bounds = array<i64: 1, 1, 2, 16, 16>}, {pipeline_mode = #tpu.pipeline_mode<synchronous>, transform_indices = @transform_3, window_bounds = array<i64: 9, 12, 16>}, {pipeline_mode = #tpu.pipeline_mode<synchronous>, transform_indices = @transform_4, window_bounds = array<i64: 12, 1>}, {transform_indices = @transform_5, window_bounds = array<i64: 1, 12, 128>}]} {
    %cst = arith.constant 0.000000e+00 : f32
    %0 = vector.broadcast %cst : f32 to vector<16x1xf32>
    %c0 = arith.constant 0 : index
    %c0_0 = arith.constant 0 : index
    %1 = vector.load %arg8[%c0, %c0_0] : memref<16x162xf32, #tpu.memory_space<vmem>>, vector<16x1xf32>
    tpu.vector_store %arg8[%c0, %c0_0], %0 {strides = array<i32>} : memref<16x162xf32, #tpu.memory_space<vmem>>, vector<16x1xf32>,
    %c0_1 = arith.constant 0 : index
    %c0_2 = arith.constant 0 : index
    %c0_3 = arith.constant 0 : index
    %c0_4 = arith.constant 0 : index
    %c0_5 = arith.constant 0 : index
    %2 = vector.load %arg4[%c0_1, %c0_2, %c0_3, %c0_4, %c0_5] : memref<1x1x2x16x16xf32, #tpu.memory_space<vmem>>, vector<1x1x1x16x16xf32>
    %3 = vector.shape_cast %2 : vector<1x1x1x16x16xf32> to vector<16x16xf32>
    %c0_6 = arith.constant 0 : index
    %c1 = arith.constant 1 : index
    %4 = vector.load %arg8[%c0_6, %c1] : memref<16x162xf32, #tpu.memory_space<vmem>>, vector<16x16xf32>
    tpu.vector_store %arg8[%c0_6, %c1], %3 {strides = array<i32>} : memref<16x162xf32, #tpu.memory_space<vmem>>, vector<16x16xf32>,
    %c0_7 = arith.constant 0 : index
    %c0_8 = arith.constant 0 : index
    %c0_9 = arith.constant 0 : index
    %5 = vector.load %arg3[%c0_7, %c0_8, %c0_9] : memref<1x16x128xf32, #tpu.memory_space<vmem>>, vector<1x16x128xf32>
    %6 = vector.shape_cast %5 : vector<1x16x128xf32> to vector<16x128xf32>
    %c0_10 = arith.constant 0 : index
    %c17 = arith.constant 17 : index
    %7 = vector.load %arg8[%c0_10, %c17] : memref<16x162xf32, #tpu.memory_space<vmem>>, vector<16x128xf32>
    tpu.vector_store %arg8[%c0_10, %c17], %6 {strides = array<i32>} : memref<16x162xf32, #tpu.memory_space<vmem>>, vector<16x128xf32>,
    %c0_11 = arith.constant 0 : index
    %c0_12 = arith.constant 0 : index
    %c1_13 = arith.constant 1 : index
    %c0_14 = arith.constant 0 : index
    %c0_15 = arith.constant 0 : index
    %8 = vector.load %arg4[%c0_11, %c0_12, %c1_13, %c0_14, %c0_15] : memref<1x1x2x16x16xf32, #tpu.memory_space<vmem>>, vector<1x1x1x16x16xf32>
    %9 = vector.shape_cast %8 : vector<1x1x1x16x16xf32> to vector<16x16xf32>
    %c0_16 = arith.constant 0 : index
    %c145 = arith.constant 145 : index
    %10 = vector.load %arg8[%c0_16, %c145] : memref<16x162xf32, #tpu.memory_space<vmem>>, vector<16x16xf32>
    tpu.vector_store %arg8[%c0_16, %c145], %9 {strides = array<i32>} : memref<16x162xf32, #tpu.memory_space<vmem>>, vector<16x16xf32>,
    %c0_17 = arith.constant 0 : index
    %c161 = arith.constant 161 : index
    %11 = vector.load %arg8[%c0_17, %c161] : memref<16x162xf32, #tpu.memory_space<vmem>>, vector<16x1xf32>
    tpu.vector_store %arg8[%c0_17, %c161], %0 {strides = array<i32>} : memref<16x162xf32, #tpu.memory_space<vmem>>, vector<16x1xf32>,
    %c0_18 = arith.constant 0 : index
    %c0_19 = arith.constant 0 : index
    %12 = vector.load %arg8[%c0_18, %c0_19] : memref<16x162xf32, #tpu.memory_space<vmem>>, vector<16x128xf32>
    %c0_20 = arith.constant 0 : index
    %c0_21 = arith.constant 0 : index
    %c0_22 = arith.constant 0 : index
    %13 = vector.load %arg5[%c0_20, %c0_21, %c0_22] : memref<9x12x16xf32, #tpu.memory_space<vmem>>, vector<1x12x16xf32>
    %14 = vector.shape_cast %13 : vector<1x12x16xf32> to vector<12x16xf32>
    %cst_23 = arith.constant dense<0.000000e+00> : vector<12x128xf32>
    %15 = tpu.matmul %14, %12, %cst_23 {dimension_numbers = #tpu.dot_dimension_numbers<[1], [0], [0], [1], [0, 0, 1, 1], [], []>} : vector<12x16xf32>, vector<16x128xf32>, vector<12x128xf32> -> vector<12x128xf32>
    %c0_24 = arith.constant 0 : index
    %c16 = arith.constant 16 : index
    %16 = vector.load %arg8[%c0_24, %c16] : memref<16x162xf32, #tpu.memory_space<vmem>>, vector<16x128xf32>
    %c3 = arith.constant 3 : index
    %c0_25 = arith.constant 0 : index
    %c0_26 = arith.constant 0 : index
    %17 = vector.load %arg5[%c3, %c0_25, %c0_26] : memref<9x12x16xf32, #tpu.memory_space<vmem>>, vector<1x12x16xf32>
    %18 = vector.shape_cast %17 : vector<1x12x16xf32> to vector<12x16xf32>
    %cst_27 = arith.constant dense<0.000000e+00> : vector<12x128xf32>
    %19 = tpu.matmul %18, %16, %cst_27 {dimension_numbers = #tpu.dot_dimension_numbers<[1], [0], [0], [1], [0, 0, 1, 1], [], []>} : vector<12x16xf32>, vector<16x128xf32>, vector<12x128xf32> -> vector<12x128xf32>
    %20 = arith.addf %15, %19 : vector<12x128xf32>
    %c0_28 = arith.constant 0 : index
    %c32 = arith.constant 32 : index
    %21 = vector.load %arg8[%c0_28, %c32] : memref<16x162xf32, #tpu.memory_space<vmem>>, vector<16x128xf32>
    %c6 = arith.constant 6 : index
    %c0_29 = arith.constant 0 : index
    %c0_30 = arith.constant 0 : index
    %22 = vector.load %arg5[%c6, %c0_29, %c0_30] : memref<9x12x16xf32, #tpu.memory_space<vmem>>, vector<1x12x16xf32>
    %23 = vector.shape_cast %22 : vector<1x12x16xf32> to vector<12x16xf32>
    %cst_31 = arith.constant dense<0.000000e+00> : vector<12x128xf32>
    %24 = tpu.matmul %23, %21, %cst_31 {dimension_numbers = #tpu.dot_dimension_numbers<[1], [0], [0], [1], [0, 0, 1, 1], [], []>} : vector<12x16xf32>, vector<16x128xf32>, vector<12x128xf32> -> vector<12x128xf32>
    %25 = arith.addf %20, %24 : vector<12x128xf32>
    %c0_32 = arith.constant 0 : index
    %c1_33 = arith.constant 1 : index
    %26 = vector.load %arg8[%c0_32, %c1_33] : memref<16x162xf32, #tpu.memory_space<vmem>>, vector<16x128xf32>
    %c1_34 = arith.constant 1 : index
    %c0_35 = arith.constant 0 : index
    %c0_36 = arith.constant 0 : index
    %27 = vector.load %arg5[%c1_34, %c0_35, %c0_36] : memref<9x12x16xf32, #tpu.memory_space<vmem>>, vector<1x12x16xf32>
    %28 = vector.shape_cast %27 : vector<1x12x16xf32> to vector<12x16xf32>
    %cst_37 = arith.constant dense<0.000000e+00> : vector<12x128xf32>
    %29 = tpu.matmul %28, %26, %cst_37 {dimension_numbers = #tpu.dot_dimension_numbers<[1], [0], [0], [1], [0, 0, 1, 1], [], []>} : vector<12x16xf32>, vector<16x128xf32>, vector<12x128xf32> -> vector<12x128xf32>
    %c0_38 = arith.constant 0 : index
    %c17_39 = arith.constant 17 : index
    %30 = vector.load %arg8[%c0_38, %c17_39] : memref<16x162xf32, #tpu.memory_space<vmem>>, vector<16x128xf32>
    %c4 = arith.constant 4 : index
    %c0_40 = arith.constant 0 : index
    %c0_41 = arith.constant 0 : index
    %31 = vector.load %arg5[%c4, %c0_40, %c0_41] : memref<9x12x16xf32, #tpu.memory_space<vmem>>, vector<1x12x16xf32>
    %32 = vector.shape_cast %31 : vector<1x12x16xf32> to vector<12x16xf32>
    %cst_42 = arith.constant dense<0.000000e+00> : vector<12x128xf32>
    %33 = tpu.matmul %32, %30, %cst_42 {dimension_numbers = #tpu.dot_dimension_numbers<[1], [0], [0], [1], [0, 0, 1, 1], [], []>} : vector<12x16xf32>, vector<16x128xf32>, vector<12x128xf32> -> vector<12x128xf32>
    %34 = arith.addf %29, %33 : vector<12x128xf32>
    %c0_43 = arith.constant 0 : index
    %c33 = arith.constant 33 : index
    %35 = vector.load %arg8[%c0_43, %c33] : memref<16x162xf32, #tpu.memory_space<vmem>>, vector<16x128xf32>
    %c7 = arith.constant 7 : index
    %c0_44 = arith.constant 0 : index
    %c0_45 = arith.constant 0 : index
    %36 = vector.load %arg5[%c7, %c0_44, %c0_45] : memref<9x12x16xf32, #tpu.memory_space<vmem>>, vector<1x12x16xf32>
    %37 = vector.shape_cast %36 : vector<1x12x16xf32> to vector<12x16xf32>
    %cst_46 = arith.constant dense<0.000000e+00> : vector<12x128xf32>
    %38 = tpu.matmul %37, %35, %cst_46 {dimension_numbers = #tpu.dot_dimension_numbers<[1], [0], [0], [1], [0, 0, 1, 1], [], []>} : vector<12x16xf32>, vector<16x128xf32>, vector<12x128xf32> -> vector<12x128xf32>
    %39 = arith.addf %34, %38 : vector<12x128xf32>
    %c0_47 = arith.constant 0 : index
    %c2 = arith.constant 2 : index
    %40 = vector.load %arg8[%c0_47, %c2] : memref<16x162xf32, #tpu.memory_space<vmem>>, vector<16x128xf32>
    %c2_48 = arith.constant 2 : index
    %c0_49 = arith.constant 0 : index
    %c0_50 = arith.constant 0 : index
    %41 = vector.load %arg5[%c2_48, %c0_49, %c0_50] : memref<9x12x16xf32, #tpu.memory_space<vmem>>, vector<1x12x16xf32>
    %42 = vector.shape_cast %41 : vector<1x12x16xf32> to vector<12x16xf32>
    %cst_51 = arith.constant dense<0.000000e+00> : vector<12x128xf32>
    %43 = tpu.matmul %42, %40, %cst_51 {dimension_numbers = #tpu.dot_dimension_numbers<[1], [0], [0], [1], [0, 0, 1, 1], [], []>} : vector<12x16xf32>, vector<16x128xf32>, vector<12x128xf32> -> vector<12x128xf32>
    %c0_52 = arith.constant 0 : index
    %c18 = arith.constant 18 : index
    %44 = vector.load %arg8[%c0_52, %c18] : memref<16x162xf32, #tpu.memory_space<vmem>>, vector<16x128xf32>
    %c5 = arith.constant 5 : index
    %c0_53 = arith.constant 0 : index
    %c0_54 = arith.constant 0 : index
    %45 = vector.load %arg5[%c5, %c0_53, %c0_54] : memref<9x12x16xf32, #tpu.memory_space<vmem>>, vector<1x12x16xf32>
    %46 = vector.shape_cast %45 : vector<1x12x16xf32> to vector<12x16xf32>
    %cst_55 = arith.constant dense<0.000000e+00> : vector<12x128xf32>
    %47 = tpu.matmul %46, %44, %cst_55 {dimension_numbers = #tpu.dot_dimension_numbers<[1], [0], [0], [1], [0, 0, 1, 1], [], []>} : vector<12x16xf32>, vector<16x128xf32>, vector<12x128xf32> -> vector<12x128xf32>
    %48 = arith.addf %43, %47 : vector<12x128xf32>
    %c0_56 = arith.constant 0 : index
    %c34 = arith.constant 34 : index
    %49 = vector.load %arg8[%c0_56, %c34] : memref<16x162xf32, #tpu.memory_space<vmem>>, vector<16x128xf32>
    %c8 = arith.constant 8 : index
    %c0_57 = arith.constant 0 : index
    %c0_58 = arith.constant 0 : index
    %50 = vector.load %arg5[%c8, %c0_57, %c0_58] : memref<9x12x16xf32, #tpu.memory_space<vmem>>, vector<1x12x16xf32>
    %51 = vector.shape_cast %50 : vector<1x12x16xf32> to vector<12x16xf32>
    %cst_59 = arith.constant dense<0.000000e+00> : vector<12x128xf32>
    %52 = tpu.matmul %51, %49, %cst_59 {dimension_numbers = #tpu.dot_dimension_numbers<[1], [0], [0], [1], [0, 0, 1, 1], [], []>} : vector<12x16xf32>, vector<16x128xf32>, vector<12x128xf32> -> vector<12x128xf32>
    %53 = arith.addf %48, %52 : vector<12x128xf32>
    %c0_60 = arith.constant 0 : index
    %c0_61 = arith.constant 0 : index
    %54 = vector.load %arg2[%c0_60, %c0_61] : memref<2x128xf32, #tpu.memory_space<vmem>>, vector<1x128xf32>
    %55 = vector.broadcast %54 : vector<1x128xf32> to vector<12x128xf32>
    %56 = arith.mulf %25, %55 : vector<12x128xf32>
    %57 = arith.addf %39, %56 : vector<12x128xf32>
    %c1_62 = arith.constant 1 : index
    %c0_63 = arith.constant 0 : index
    %58 = vector.load %arg2[%c1_62, %c0_63] : memref<2x128xf32, #tpu.memory_space<vmem>>, vector<1x128xf32>
    %59 = vector.broadcast %58 : vector<1x128xf32> to vector<12x128xf32>
    %60 = arith.mulf %53, %59 : vector<12x128xf32>
    %61 = arith.addf %57, %60 : vector<12x128xf32>
    %c0_64 = arith.constant 0 : index
    %c0_65 = arith.constant 0 : index
    %62 = vector.load %arg6[%c0_64, %c0_65] : memref<12x1xf32, #tpu.memory_space<vmem>>, vector<12x1xf32>
    %63 = vector.broadcast %62 : vector<12x1xf32> to vector<12x128xf32>
    %64 = arith.addf %61, %63 : vector<12x128xf32>
    %65 = vector.shape_cast %64 : vector<12x128xf32> to vector<1x12x128xf32>
    %c0_66 = arith.constant 0 : index
    %c0_67 = arith.constant 0 : index
    %c0_68 = arith.constant 0 : index
    %66 = vector.load %arg7[%c0_66, %c0_67, %c0_68] : memref<1x12x128xf32, #tpu.memory_space<vmem>>, vector<1x12x128xf32>
    tpu.vector_store %arg7[%c0_66, %c0_67, %c0_68], %65 {strides = array<i32>} : memref<1x12x128xf32, #tpu.memory_space<vmem>>, vector<1x12x128xf32>,
    return
  }
  func.func @transform_0(%arg0: i32, %arg1: i32) -> (i32, i32) {
    %c0_i32 = arith.constant 0 : i32
    %c0_i32_0 = arith.constant 0 : i32
    %c0_i32_1 = arith.constant 0 : i32
    return %c0_i32, %c0_i32_0 : i32, i32
  }
  func.func @transform_1(%arg0: i32, %arg1: i32) -> (i32, i32, i32) {
    %c0_i32 = arith.constant 0 : i32
    %c0_i32_0 = arith.constant 0 : i32
    return %arg0, %c0_i32, %arg1 : i32, i32, i32
  }
  func.func @transform_2(%arg0: i32, %arg1: i32) -> (i32, i32, i32, i32, i32) {
    %c0_i32 = arith.constant 0 : i32
    %c0_i32_0 = arith.constant 0 : i32
    %c0_i32_1 = arith.constant 0 : i32
    %c0_i32_2 = arith.constant 0 : i32
    return %arg0, %arg1, %c0_i32, %c0_i32_0, %c0_i32_1 : i32, i32, i32, i32, i32
  }
  func.func @transform_3(%arg0: i32, %arg1: i32) -> (i32, i32, i32) {
    %c0_i32 = arith.constant 0 : i32
    %c0_i32_0 = arith.constant 0 : i32
    %c0_i32_1 = arith.constant 0 : i32
    %c0_i32_2 = arith.constant 0 : i32
    return %c0_i32, %c0_i32_0, %c0_i32_1 : i32, i32, i32
  }
  func.func @transform_4(%arg0: i32, %arg1: i32) -> (i32, i32) {
    %c0_i32 = arith.constant 0 : i32
    %c0_i32_0 = arith.constant 0 : i32
    %c0_i32_1 = arith.constant 0 : i32
    return %c0_i32, %c0_i32_0 : i32, i32
  }
  func.func @transform_5(%arg0: i32, %arg1: i32) -> (i32, i32, i32) {
    %c0_i32 = arith.constant 0 : i32
    %c0_i32_0 = arith.constant 0 : i32
    return %arg0, %c0_i32, %arg1 : i32, i32, i32
  }
}

</mosaic_0001>

<llo_original>
// kernel: upsample_one_step.1
$region0: #{upsample_one_step.1}
  #allocation0 [shape = 'u32[]', space=smem, size = 0x4, offset = 0x4, fixed_abs, tag = 'smem constant byte address 0x4 - core index']
  #allocation1 [shape = 'u32[144,128]{1,0:T(1,128)}', space=vmem, size = 0x12000, scoped, tag = 'internal scratch']
  #allocation2 [shape = 'f32[16,162]{1,0:T(8,128)}', space=vmem, size = 0x4000, scoped, tag = 'scratch operand']
  %s0 = inlined_call_operand.vmem [shape: f32[2,128], index: 0, kind: input, shape index: {}]
  %s1 = inlined_call_operand.vmem [shape: f32[2,16,256], index: 1, kind: input, shape index: {}]
  %s2 = inlined_call_operand.vmem [shape: f32[2,2,2,16,16], index: 2, kind: input, shape index: {}]
  %s3 = inlined_call_operand.vmem [shape: f32[9,12,16], index: 3, kind: input, shape index: {}]
  %s4 = inlined_call_operand.vmem [shape: f32[12,1], index: 4, kind: input, shape index: {}]
  %s5 = inlined_call_operand.vmem [shape: f32[2,12,256], index: 5, kind: output, shape index: {}]
  %s6 = sld [smem:[#allocation0]]
  $region125: #{upsample_one_step.1} parent=0
    _
  %s8 = ssub.s32 1, %s6
  %s9 = scalar_select 0, %s8, %s6
  $region1: #{upsample_one_step.1} parent=0
    #allocation3 [shape = 'u8[16384]{0}', space=vmem, size = 0x4000, scoped, tag = 'input window, operand 1']
    #allocation4 [shape = 'u8[16384]{0}', space=vmem, size = 0x4000, scoped, tag = 'output window, operand 0']
    loop: start=0, step=1, limit=6
    $region2: #{upsample_one_step.1} parent=1 // loop_pre_header
      _
    $region3: #{upsample_one_step.1} parent=1 // loop_header
      %s11 = sphi 0, %s15
      %p12 = scmp.ge.s32.totalorder %s11, 6
      %s18 = sphi 0, %s30
      %s19 = sphi 0, %s26
      %s20 = sphi 0, %s18
      %s21 = sphi 0, %s19
      %s22 = sphi 0, %s20
      %s23 = sphi 0, %s21
      %s31 = sphi 0, %s31
      %s33 = sphi 0, %s31
      %s34 = sphi 0, %s33
      %s48 = sphi 0, %s34
      %s56 = sphi 0, %s58
      %s59 = sphi 0, %s56
      %s60 = sphi 0, %s59
      %s76 = sphi 0, %s60
      %s84 = sphi 0, %s86
      %s87 = sphi 0, %s84
      %s88 = sphi 0, %s87
      %s104 = sphi 0, %s88
      %s108 = sphi 0, %s108
      %s110 = sphi 0, %s108
      %s111 = sphi 0, %s110
      %s125 = sphi 0, %s111
      %s129 = sphi 0, %s129
      %s131 = sphi 0, %s129
      %s132 = sphi 0, %s131
      %s146 = sphi 0, %s132
      %s154 = sphi 0, %s156
      %s157 = sphi 0, %s154
      %s158 = sphi 0, %s157
      %s174 = sphi 0, %s158
    $region4: #{upsample_one_step.1} parent=1 // loop_header_branch
      %14 = sbr.rel (%p12) target = $region8
    $region5: #{upsample_one_step.1} parent=1 // loop_body
      %s16 = ssub.s32 %s11, 1
      %s17 = ssub.s32 %s11, 2
      %s24 = sadd.s32 1, %s19
      %p25 = scmp.ge.s32.totalorder %s24, 2
      %s26 = scalar_select %p25, 0, %s24
      %s27 = sadd.s32 1, %s18
      %s28 = scalar_select %p25, %s27, %s18
      %p29 = scmp.ge.s32.totalorder %s28, 2
      %s30 = scalar_select %p29, 0, %s28
      %s32 = sadd.s32 %s31, 1
      %p35 = scmp.eq.s32.totalorder %s11, 3
      %p36 = scmp.ne.s32.totalorder %s31, %s33
      %p37 = scmp.eq.s32.totalorder %s11, 0
      %p38 = por %p36, %p37
      %p39 = scmp.ne.s32.totalorder %s31, %s33
      %p40 = scmp.eq.s32.totalorder %s16, 3
      %p41 = por %p39, %p40
      %p42 = scmp.ne.s32.totalorder %s33, %s34
      %p43 = scmp.eq.s32.totalorder %s16, 0
      %p44 = por %p42, %p43
      %p45 = scmp.ne.s32.totalorder %s33, %s34
      %p46 = scmp.eq.s32.totalorder %s17, 3
      %p47 = por %p45, %p46
      %p49 = scmp.ne.s32.totalorder %s34, %s48
      %p50 = scmp.eq.s32.totalorder %s17, 0
      %p51 = por %p49, %p50
      %s52 = ssub.s32 %s18, %s30
      %s53 = ssub.s32 %s19, %s26
      %s54 = sor.u32 %s52, %s53
      %p55 = scmp.eq.s32.totalorder %s54, 0
      %s57 = sadd.s32 %s56, 1
      %s58 = scalar_select %p55, %s56, %s57
      %p61 = pneg %p55
      %p62 = scmp.eq.s32.totalorder %s11, 3
      %p63 = por %p61, %p62
      %p64 = scmp.ne.s32.totalorder %s56, %s59
      %p65 = scmp.eq.s32.totalorder %s11, 0
      %p66 = por %p64, %p65
      %p67 = scmp.ne.s32.totalorder %s56, %s59
      %p68 = scmp.eq.s32.totalorder %s16, 3
      %p69 = por %p67, %p68
      %p70 = scmp.ne.s32.totalorder %s59, %s60
      %p71 = scmp.eq.s32.totalorder %s16, 0
      %p72 = por %p70, %p71
      %p73 = scmp.ne.s32.totalorder %s59, %s60
      %p74 = scmp.eq.s32.totalorder %s17, 3
      %p75 = por %p73, %p74
      %p77 = scmp.ne.s32.totalorder %s60, %s76
      %p78 = scmp.eq.s32.totalorder %s17, 0
      %p79 = por %p77, %p78
      %s80 = ssub.s32 %s18, %s30
      %s81 = ssub.s32 %s19, %s26
      %s82 = sor.u32 %s80, %s81
      %p83 = scmp.eq.s32.totalorder %s82, 0
      %s85 = sadd.s32 %s84, 1
      %s86 = scalar_select %p83, %s84, %s85
      %p89 = pneg %p83
      %p90 = scmp.eq.s32.totalorder %s11, 3
      %p91 = por %p89, %p90
      %p92 = scmp.ne.s32.totalorder %s84, %s87
      %p93 = scmp.eq.s32.totalorder %s11, 0
      %p94 = por %p92, %p93
      %p95 = scmp.ne.s32.totalorder %s84, %s87
      %p96 = scmp.eq.s32.totalorder %s16, 3
      %p97 = por %p95, %p96
      %p98 = scmp.ne.s32.totalorder %s87, %s88
      %p99 = scmp.eq.s32.totalorder %s16, 0
      %p100 = por %p98, %p99
      %p101 = scmp.ne.s32.totalorder %s87, %s88
      %p102 = scmp.eq.s32.totalorder %s17, 3
      %p103 = por %p101, %p102
      %p105 = scmp.ne.s32.totalorder %s88, %s104
      %p106 = scmp.eq.s32.totalorder %s17, 0
      %p107 = por %p105, %p106
      %s109 = sadd.s32 %s108, 1
      %p112 = scmp.eq.s32.totalorder %s11, 3
      %p113 = scmp.ne.s32.totalorder %s108, %s110
      %p114 = scmp.eq.s32.totalorder %s11, 0
      %p115 = por %p113, %p114
      %p116 = scmp.ne.s32.totalorder %s108, %s110
      %p117 = scmp.eq.s32.totalorder %s16, 3
      %p118 = por %p116, %p117
      %p119 = scmp.ne.s32.totalorder %s110, %s111
      %p120 = scmp.eq.s32.totalorder %s16, 0
      %p121 = por %p119, %p120
      %p122 = scmp.ne.s32.totalorder %s110, %s111
      %p123 = scmp.eq.s32.totalorder %s17, 3
      %p124 = por %p122, %p123
      %p126 = scmp.ne.s32.totalorder %s111, %s125
      %p127 = scmp.eq.s32.totalorder %s17, 0
      %p128 = por %p126, %p127
      %s130 = sadd.s32 %s129, 1
      %p133 = scmp.eq.s32.totalorder %s11, 3
      %p134 = scmp.ne.s32.totalorder %s129, %s131
      %p135 = scmp.eq.s32.totalorder %s11, 0
      %p136 = por %p134, %p135
      %p137 = scmp.ne.s32.totalorder %s129, %s131
      %p138 = scmp.eq.s32.totalorder %s16, 3
      %p139 = por %p137, %p138
      %p140 = scmp.ne.s32.totalorder %s131, %s132
      %p141 = scmp.eq.s32.totalorder %s16, 0
      %p142 = por %p140, %p141
      %p143 = scmp.ne.s32.totalorder %s131, %s132
      %p144 = scmp.eq.s32.totalorder %s17, 3
      %p145 = por %p143, %p144
      %p147 = scmp.ne.s32.totalorder %s132, %s146
      %p148 = scmp.eq.s32.totalorder %s17, 0
      %p149 = por %p147, %p148
      %s150 = ssub.s32 %s18, %s30
      %s151 = ssub.s32 %s19, %s26
      %s152 = sor.u32 %s150, %s151
      %p153 = scmp.eq.s32.totalorder %s152, 0
      %s155 = sadd.s32 %s154, 1
      %s156 = scalar_select %p153, %s154, %s155
      %p159 = pneg %p153
      %p160 = scmp.eq.s32.totalorder %s11, 3
      %p161 = por %p159, %p160
      %p162 = scmp.ne.s32.totalorder %s154, %s157
      %p163 = scmp.eq.s32.totalorder %s11, 0
      %p164 = por %p162, %p163
      %p165 = scmp.ne.s32.totalorder %s154, %s157
      %p166 = scmp.eq.s32.totalorder %s16, 3
      %p167 = por %p165, %p166
      %p168 = scmp.ne.s32.totalorder %s157, %s158
      %p169 = scmp.eq.s32.totalorder %s16, 0
      %p170 = por %p168, %p169
      %p171 = scmp.ne.s32.totalorder %s157, %s158
      %p172 = scmp.eq.s32.totalorder %s17, 3
      %p173 = por %p171, %p172
      %p175 = scmp.ne.s32.totalorder %s158, %s174
      %p176 = scmp.eq.s32.totalorder %s17, 0
      %p177 = por %p175, %p176
      %p178 = scmp.le.s32.totalorder 1, %s11
      %p179 = scmp.lt.s32.totalorder %s11, 5
      %p180 = pnand %p178, %p179
      %p181 = pneg %p180
      // Predicated region
      $region9: #{upsample_one_step.1} parent=5 // pred_check
        _
      $region10: #{upsample_one_step.1} parent=5 // pred_check_branch
        %183 = sbr.rel (%p180) target = $region12
      $region11: #{upsample_one_step.1} parent=5 // pred_region
        %s184 = ssub.s32 %s11, 1
        // Predicated region
        $region13: #{upsample_one_step.1} parent=11 // pred_check
          %p185 = pneg %p44
        $region14: #{upsample_one_step.1} parent=11 // pred_check_branch
          %187 = sbr.rel (%p185) target = $region16
        $region15: #{upsample_one_step.1} parent=11 // pred_region
          _
        $region16: #{upsample_one_step.1} parent=11 // pred_fallthru
          _
        // Predicated region
        $region17: #{upsample_one_step.1} parent=11 // pred_check
          %p188 = pneg %p121
        $region18: #{upsample_one_step.1} parent=11 // pred_check_branch
          %190 = sbr.rel (%p188) target = $region20
        $region19: #{upsample_one_step.1} parent=11 // pred_region
          _
        $region20: #{upsample_one_step.1} parent=11 // pred_fallthru
          _
        // Predicated region
        $region21: #{upsample_one_step.1} parent=11 // pred_check
          %p191 = pneg %p142
        $region22: #{upsample_one_step.1} parent=11 // pred_check_branch
          %193 = sbr.rel (%p191) target = $region24
        $region23: #{upsample_one_step.1} parent=11 // pred_region
          _
        $region24: #{upsample_one_step.1} parent=11 // pred_fallthru
          _
      $region12: #{upsample_one_step.1} parent=5 // pred_fallthru
        _
      %p194 = scmp.lt.s32.totalorder %s11, 4
      // Predicated region
      $region25: #{upsample_one_step.1} parent=5 // pred_check
        %p195 = pneg %p194
      $region26: #{upsample_one_step.1} parent=5 // pred_check_branch
        %197 = sbr.rel (%p195) target = $region28
      $region27: #{upsample_one_step.1} parent=5 // pred_region
        // Predicated region
        $region29: #{upsample_one_step.1} parent=27 // pred_check
          %p198 = pneg %p66
        $region30: #{upsample_one_step.1} parent=27 // pred_check_branch
          %200 = sbr.rel (%p198) target = $region32
        $region31: #{upsample_one_step.1} parent=27 // pred_region
          %s201 = sand.u32 %s56, 1
          %s202 = sand.u32 %s56, 1
          %s203 = smul.addr %s202, 16
          %s204 = scalar_lea.vmem [#allocation3], %s203
          %s205 = smul.addr %s18, 4
          %s206 = sadd.s32 %s19, %s205
          %s207 = smul.addr %s206, 8
          %s208 = scalar_lea.vmem %s1, %s207
          // Predicated region
          $region33: #{upsample_one_step.1} parent=31 // pred_check
            _
          $region34: #{upsample_one_step.1} parent=31 // pred_check_branch
            %210 = sbr.rel (0) target = $region36
          $region35: #{upsample_one_step.1} parent=31 // pred_region
            // Predicated region
            $region37: #{upsample_one_step.1} parent=35 // pred_check
              _
            $region38: #{upsample_one_step.1} parent=35 // pred_check_branch
              %212 = sbr.rel (0) target = $region40
            $region39: #{upsample_one_step.1} parent=35 // pred_region
              // Predicated region
              $region52: #{upsample_one_step.1} parent=39 // pred_check
                _
              $region53: #{upsample_one_step.1} parent=39 // pred_check_branch
                %229 = sbr.rel (0) target = $region55
              $region54: #{upsample_one_step.1} parent=39 // pred_region
                loop: start=0, step=1, limit=1
                $region56: #{upsample_one_step.1} parent=54 // loop_pre_header
                  _
                $region57: #{upsample_one_step.1} parent=54 // loop_header
                  %s231 = sphi 0, %s235
                  %p232 = scmp.ge.s32.totalorder %s231, 1
                  %s236 = sphi %s208, %s208
                  %s237 = sphi %s204, %s204
                $region58: #{upsample_one_step.1} parent=54 // loop_header_branch
                  %234 = sbr.rel (%p232) target = $region62
                $region59: #{upsample_one_step.1} parent=54 // loop_body
                  %v238 = vld [vmem:[%s236] sm:$0xff]
                  %239 = vst [vmem:[%s237] sm:$0xff] %v238
                  %v240 = vld [vmem:[%s236 + $0x10] sm:$0xff]
                  %241 = vst [vmem:[%s237 + $0x8] sm:$0xff] %v240
                $region60: #{upsample_one_step.1} parent=54 // loop_footer
                  %s235 = sadd.s32 1, %s231
                $region61: #{upsample_one_step.1} parent=54 // loop_footer_branch
                  %230 = sbr.rel target = $region57
                $region62: #{upsample_one_step.1} parent=54 // loop_exit
                  _
              $region55: #{upsample_one_step.1} parent=39 // pred_fallthru
                _
              // Predicated region
              $region63: #{upsample_one_step.1} parent=39 // pred_check
                _
              $region64: #{upsample_one_step.1} parent=39 // pred_check_branch
                %243 = sbr.rel target = $region66
              $region65: #{upsample_one_step.1} parent=39 // pred_region
                _
              $region66: #{upsample_one_step.1} parent=39 // pred_fallthru
                _
            $region40: #{upsample_one_step.1} parent=35 // pred_fallthru
              _
            // Predicated region
            $region41: #{upsample_one_step.1} parent=35 // pred_check
              _
            $region42: #{upsample_one_step.1} parent=35 // pred_check_branch
              %214 = sbr.rel target = $region44
            $region43: #{upsample_one_step.1} parent=35 // pred_region
              loop: start=0, step=1, limit=1
              $region45: #{upsample_one_step.1} parent=43 // loop_pre_header
                _
              $region46: #{upsample_one_step.1} parent=43 // loop_header
                %s217 = sphi 0, %s221
                %p218 = scmp.ge.s32.totalorder %s217, 1
                %s222 = sphi %s208, %s208
                %s223 = sphi %s204, %s204
              $region47: #{upsample_one_step.1} parent=43 // loop_header_branch
                %220 = sbr.rel (%p218) target = $region51
              $region48: #{upsample_one_step.1} parent=43 // loop_body
                %v224 = vld [vmem:[%s222] sm:$0xff]
                %225 = vst [vmem:[%s223] sm:$0xff] %v224
                %v226 = vld [vmem:[%s222 + $0x10] sm:$0xff]
                %227 = vst [vmem:[%s223 + $0x8] sm:$0xff] %v226
              $region49: #{upsample_one_step.1} parent=43 // loop_footer
                %s221 = sadd.s32 1, %s217
              $region50: #{upsample_one_step.1} parent=43 // loop_footer_branch
                %216 = sbr.rel target = $region46
              $region51: #{upsample_one_step.1} parent=43 // loop_exit
                _
            $region44: #{upsample_one_step.1} parent=35 // pred_fallthru
              _
          $region36: #{upsample_one_step.1} parent=31 // pred_fallthru
            _
          %244 = vnop
        $region32: #{upsample_one_step.1} parent=27 // pred_fallthru
          _
        // Predicated region
        $region67: #{upsample_one_step.1} parent=27 // pred_check
          %p245 = pneg %p94
        $region68: #{upsample_one_step.1} parent=27 // pred_check_branch
          %247 = sbr.rel (%p245) target = $region70
        $region69: #{upsample_one_step.1} parent=27 // pred_region
          %p248 = scmp.lt.s32.totalorder %s18, 1
          %s249 = scalar_select %p248, %s18, 1
          %p250 = scmp.lt.s32.totalorder %s19, 1
          %s251 = scalar_select %p250, %s19, 1
          %s252 = smul.addr %s251, 4
          %s253 = smul.addr %s249, 8
          %s254 = sadd.s32 %s252, %s253
          %s255 = smul.addr %s254, 8
          %s256 = scalar_lea.vmem %s2, %s255
        $region70: #{upsample_one_step.1} parent=27 // pred_fallthru
          _
      $region28: #{upsample_one_step.1} parent=5 // pred_fallthru
        _
      %p257 = scmp.le.s32.totalorder 1, %s11
      %p258 = scmp.lt.s32.totalorder %s11, 5
      %p259 = pnand %p257, %p258
      %p260 = pneg %p259
      // Predicated region
      $region71: #{upsample_one_step.1} parent=5 // pred_check
        _
      $region72: #{upsample_one_step.1} parent=5 // pred_check_branch
        %262 = sbr.rel (%p259) target = $region74
      $region73: #{upsample_one_step.1} parent=5 // pred_region
        %s263 = ssub.s32 %s11, 1
        %s264 = sand.u32 %s59, 1
        %s265 = sand.u32 %s59, 1
        %s266 = smul.addr %s265, 16
        %s267 = scalar_lea.vmem [#allocation3], %s266
        // Predicated region
        $region75: #{upsample_one_step.1} parent=73 // pred_check
          %p268 = pneg %p72
        $region76: #{upsample_one_step.1} parent=73 // pred_check_branch
          %270 = sbr.rel (%p268) target = $region78
        $region77: #{upsample_one_step.1} parent=73 // pred_region
          _
        $region78: #{upsample_one_step.1} parent=73 // pred_fallthru
          _
        %p271 = pneg %p44
        %p272 = pneg %p41
        %s273 = sand.u32 %s59, 1
        %s274 = sand.u32 %s59, 1
        %s275 = smul.addr %s274, 16
        %s276 = scalar_lea.vmem [#allocation3], %s275
        %p277 = pneg %p72
        %p278 = pneg %p69
        %p279 = scmp.lt.s32.totalorder %s20, 1
        %s280 = scalar_select %p279, %s20, 1
        %p281 = scmp.lt.s32.totalorder %s21, 1
        %s282 = scalar_select %p281, %s21, 1
        %s283 = smul.addr %s282, 4
        %s284 = smul.addr %s280, 8
        %s285 = sadd.s32 %s283, %s284
        %s286 = smul.addr %s285, 8
        %s287 = scalar_lea.vmem %s2, %s286
        %p288 = pneg %p100
        %p289 = pneg %p97
        %p290 = pneg %p121
        %p291 = pneg %p118
        %p292 = pneg %p142
        %p293 = pneg %p139
        %p294 = pneg %p170
        %p295 = pneg %p167
        %s296 = sand.u32 %s157, 1
        %s297 = sand.u32 %s157, 1
        %s298 = smul.addr %s297, 16
        %s299 = scalar_lea.vmem [#allocation4], %s298
        %p300 = scmp.lt.s32.totalorder %s20, 1
        %s301 = scalar_select %p300, %s20, 1
        %p302 = scmp.lt.s32.totalorder %s21, 1
        %s303 = scalar_select %p302, %s21, 1
        %s304 = smul.addr %s303, 4
        %s305 = smul.addr %s301, 8
        %s306 = sadd.s32 %s304, %s305
        %s307 = smul.addr %s306, 8
        %s308 = scalar_lea.vmem %s2, %s307
        %vm309 = vcmask 7168
        %310 = vst.msk [vmem:[#allocation2] sm:$0xff] %vm309, 0.0
        %311 = vst.msk [vmem:[#allocation2 + $0x10] sm:$0xff] %vm309, 0.0
        %v312 = vld [vmem:[%s308] sm:$0xff]
        %v313 = vld [vmem:[%s308 + $0x8] sm:$0xff]
        %316 = vrot.lane.b32.xlu0 %v312, 1
        %v317 = vpop.permute.xlu0 %316
        %318 = vrot.lane.b32.xlu0 %v313, 1
        %v319 = vpop.permute.xlu0 %318
        %vm322 = vcmask 138248
        %323 = vst.msk [vmem:[#allocation2] sm:$0xff] %vm322, %v317
        %324 = vst.msk [vmem:[#allocation2 + $0x10] sm:$0xff] %vm322, %v319
        %v325 = vld [vmem:[%s267] sm:$0xff]
        %v326 = vld [vmem:[%s267 + $0x8] sm:$0xff]
        %329 = vrot.lane.b32.xlu0 %v325, 17
        %v330 = vpop.permute.xlu0 %329
        %331 = vrot.lane.b32.xlu0 %v326, 17
        %v332 = vpop.permute.xlu0 %331
        %vm335 = vcmask 1047688
        %336 = vst.msk [vmem:[#allocation2] sm:$0xff] %vm335, %v330
        %vm337 = vcmask 138240
        %338 = vst.msk [vmem:[#allocation2 + $0x8] sm:$0xff] %vm337, %v330
        %339 = vst.msk [vmem:[#allocation2 + $0x10] sm:$0xff] %vm335, %v332
        %340 = vst.msk [vmem:[#allocation2 + $0x18] sm:$0xff] %vm337, %v332
        %s341 = scalar_lea.vmem %s308, 16
        %v342 = vld [vmem:[%s341] sm:$0xff]
        %v343 = vld [vmem:[%s341 + $0x8] sm:$0xff]
        %346 = vrot.lane.b32.xlu0 %v342, 17
        %v347 = vpop.permute.xlu0 %346
        %348 = vrot.lane.b32.xlu0 %v343, 17
        %v349 = vpop.permute.xlu0 %348
        %vm352 = vcmask 269448
        %353 = vst.msk [vmem:[#allocation2 + $0x8] sm:$0xff] %vm352, %v347
        %354 = vst.msk [vmem:[#allocation2 + $0x18] sm:$0xff] %vm352, %v349
        %vm355 = vcmask 277768
        %356 = vst.msk [vmem:[#allocation2 + $0x8] sm:$0xff] %vm355, 0.0
        %357 = vst.msk [vmem:[#allocation2 + $0x18] sm:$0xff] %vm355, 0.0
        %v358 = vld [vmem:[#allocation2] sm:$0xff]
        %v359 = vld [vmem:[#allocation2 + $0x10] sm:$0xff]
        %v360 = vld [vmem:[%s3] sm:$0xff]
        %v361 = vld [vmem:[%s3 + $0x8] sm:$0xf]
        %v362 = vld [vmem:[#allocation2 + $0x8] sm:$0xff]
        %v363 = vld [vmem:[#allocation2 + $0x18] sm:$0xff]
        %s364 = scalar_lea.vmem %s3, 48
        %v365 = vld [vmem:[%s364] sm:$0xff]
        %v366 = vld [vmem:[%s364 + $0x8] sm:$0xf]
        %371 = vrot.lane.b32.xlu0 %v358, 112
        %v372 = vpop.permute.xlu0 %371
        %373 = vrot.lane.b32.xlu0 %v362, 112
        %v374 = vpop.permute.xlu0 %373
        %375 = vrot.lane.b32.xlu0 %v359, 112
        %v376 = vpop.permute.xlu0 %375
        %377 = vrot.lane.b32.xlu0 %v363, 112
        %v378 = vpop.permute.xlu0 %377
        %vm379 = vcmask 916480
        %v380 = vsel %vm379, %v372, %v374
        %v381 = vsel %vm379, %v376, %v378
        %vm384 = vcmask 130048
        %v386 = vsel %vm384, %v365, 0
        %v389 = vsel %vm384, %v366, 0
        %391 = vmatprep.subr.mxu0 0.0
        %392 = vmatpush1.msra.mxu0 %v380
        %393 = vmatprep.subr.mxu0 0.0
        %394 = vmatpush1.msra.mxu0 %v381
        %395 = vmatprep.subr.mxu0 0.0
        %396 = vmatpush1.msra.mxu0 0.0
        %397 = vmatprep.subr.mxu0 0.0
        %398 = vmatpush1.msra.mxu0 0.0
        %399 = vmatprep.subr.mxu0 0.0
        %400 = vmatpush1.msra.mxu0 0.0
        %401 = vmatprep.subr.mxu0 0.0
        %402 = vmatpush1.msra.mxu0 0.0
        %403 = vmatprep.subr.mxu0 0.0
        %404 = vmatpush1.msra.mxu0 0.0
        %405 = vmatprep.subr.mxu0 0.0
        %406 = vmatpush1.msra.mxu0 0.0
        %407 = vmatprep.subr.mxu0 0.0
        %408 = vmatpush1.msra.mxu0 0.0
        %409 = vmatprep.subr.mxu0 0.0
        %410 = vmatpush1.msra.mxu0 0.0
        %411 = vmatprep.subr.mxu0 0.0
        %412 = vmatpush1.msra.mxu0 0.0
        %413 = vmatprep.subr.mxu0 0.0
        %414 = vmatpush1.msra.mxu0 0.0
        %415 = vmatprep.subr.mxu0 0.0
        %416 = vmatpush1.msra.mxu0 0.0
        %417 = vmatprep.subr.mxu0 0.0
        %418 = vmatpush1.msra.mxu0 0.0
        %419 = vmatprep.subr.mxu0 0.0
        %420 = vmatpush1.msra.mxu0 0.0
        %421 = vmatprep.subr.mxu0 0.0
        %422 = vmatpush1.msra.mxu0 0.0
        %423 = vmatprep.subr.mxu0 0.0
        %424 = vmatpush1.msra.mxu0 0.0
        %425 = vmatprep.subr.mxu0 0.0
        %426 = vmatpush1.msra.mxu0 0.0
        %427 = vmatprep.subr.mxu0 0.0
        %428 = vmatpush1.msra.mxu0 0.0
        %429 = vmatprep.subr.mxu0 0.0
        %430 = vmatpush1.msra.mxu0 0.0
        %431 = vmatprep.subr.mxu0 0.0
        %432 = vmatpush1.msra.mxu0 0.0
        %433 = vmatprep.subr.mxu0 0.0
        %434 = vmatpush1.msra.mxu0 0.0
        %435 = vmatprep.subr.mxu0 0.0
        %436 = vmatpush1.msra.mxu0 0.0
        %437 = vmatprep.subr.mxu0 0.0
        %438 = vmatpush1.msra.mxu0 0.0
        %439 = vmatprep.subr.mxu0 0.0
        %440 = vmatpush1.msra.mxu0 0.0
        %441 = vmatprep.subr.mxu0 0.0
        %442 = vmatpush1.msra.mxu0 0.0
        %443 = vmatprep.subr.mxu0 0.0
        %444 = vmatpush1.msra.mxu0 0.0
        %445 = vmatprep.subr.mxu0 0.0
        %446 = vmatpush1.msra.mxu0 0.0
        %447 = vmatprep.subr.mxu0 0.0
        %448 = vmatpush1.msra.mxu0 0.0
        %449 = vmatprep.subr.mxu0 0.0
        %450 = vmatpush1.msra.mxu0 0.0
        %451 = vmatprep.subr.mxu0 0.0
        %452 = vmatpush1.msra.mxu0 0.0
        %453 = vmatprep.subr.mxu0 0.0
        %454 = vmatpush1.msra.mxu0 0.0
        %455 = vmatprep.mubr.f32.mxu0 0.0
        %456 = vmatmul.mubr.f32.gmra.mrb[0].mxu0 %v386
        %v457 = vpop.f32.mrb[0].mxu0
        %v458 = vadd.f32 0.0, %v457
        %v459 = vpop.f32.mrb[0].mxu0
        %460 = vmatprep.mubr.f32.mxu0 0.0
        %461 = vmatmul.mubr.f32.gmra.mrb[0].mxu0 %v389
        %v462 = vpop.f32.mrb[0].mxu0
        %v463 = vadd.f32 0.0, %v462
        %v464 = vpop.f32.mrb[0].mxu0
        %465 = vdwg.mxu0
        %v467 = vsel %vm384, %v360, 0
        %v470 = vsel %vm384, %v361, 0
        %472 = vmatprep.subr.mxu0 0.0
        %473 = vmatpush1.msra.mxu0 %v358
        %474 = vmatprep.subr.mxu0 0.0
        %475 = vmatpush1.msra.mxu0 %v359
        %476 = vmatprep.subr.mxu0 0.0
        %477 = vmatpush1.msra.mxu0 0.0
        %478 = vmatprep.subr.mxu0 0.0
        %479 = vmatpush1.msra.mxu0 0.0
        %480 = vmatprep.subr.mxu0 0.0
        %481 = vmatpush1.msra.mxu0 0.0
        %482 = vmatprep.subr.mxu0 0.0
        %483 = vmatpush1.msra.mxu0 0.0
        %484 = vmatprep.subr.mxu0 0.0
        %485 = vmatpush1.msra.mxu0 0.0
        %486 = vmatprep.subr.mxu0 0.0
        %487 = vmatpush1.msra.mxu0 0.0
        %488 = vmatprep.subr.mxu0 0.0
        %489 = vmatpush1.msra.mxu0 0.0
        %490 = vmatprep.subr.mxu0 0.0
        %491 = vmatpush1.msra.mxu0 0.0
        %492 = vmatprep.subr.mxu0 0.0
        %493 = vmatpush1.msra.mxu0 0.0
        %494 = vmatprep.subr.mxu0 0.0
        %495 = vmatpush1.msra.mxu0 0.0
        %496 = vmatprep.subr.mxu0 0.0
        %497 = vmatpush1.msra.mxu0 0.0
        %498 = vmatprep.subr.mxu0 0.0
        %499 = vmatpush1.msra.mxu0 0.0
        %500 = vmatprep.subr.mxu0 0.0
        %501 = vmatpush1.msra.mxu0 0.0
        %502 = vmatprep.subr.mxu0 0.0
        %503 = vmatpush1.msra.mxu0 0.0
        %504 = vmatprep.subr.mxu0 0.0
        %505 = vmatpush1.msra.mxu0 0.0
        %506 = vmatprep.subr.mxu0 0.0
        %507 = vmatpush1.msra.mxu0 0.0
        %508 = vmatprep.subr.mxu0 0.0
        %509 = vmatpush1.msra.mxu0 0.0
        %510 = vmatprep.subr.mxu0 0.0
        %511 = vmatpush1.msra.mxu0 0.0
        %512 = vmatprep.subr.mxu0 0.0
        %513 = vmatpush1.msra.mxu0 0.0
        %514 = vmatprep.subr.mxu0 0.0
        %515 = vmatpush1.msra.mxu0 0.0
        %516 = vmatprep.subr.mxu0 0.0
        %517 = vmatpush1.msra.mxu0 0.0
        %518 = vmatprep.subr.mxu0 0.0
        %519 = vmatpush1.msra.mxu0 0.0
        %520 = vmatprep.subr.mxu0 0.0
        %521 = vmatpush1.msra.mxu0 0.0
        %522 = vmatprep.subr.mxu0 0.0
        %523 = vmatpush1.msra.mxu0 0.0
        %524 = vmatprep.subr.mxu0 0.0
        %525 = vmatpush1.msra.mxu0 0.0
        %526 = vmatprep.subr.mxu0 0.0
        %527 = vmatpush1.msra.mxu0 0.0
        %528 = vmatprep.subr.mxu0 0.0
        %529 = vmatpush1.msra.mxu0 0.0
        %530 = vmatprep.subr.mxu0 0.0
        %531 = vmatpush1.msra.mxu0 0.0
        %532 = vmatprep.subr.mxu0 0.0
        %533 = vmatpush1.msra.mxu0 0.0
        %534 = vmatprep.subr.mxu0 0.0
        %535 = vmatpush1.msra.mxu0 0.0
        %536 = vmatprep.mubr.f32.mxu0 0.0
        %537 = vmatmul.mubr.f32.gmra.mrb[0].mxu0 %v467
        %v538 = vpop.f32.mrb[0].mxu0
        %v539 = vadd.f32 %v458, %v538
        %v540 = vpop.f32.mrb[0].mxu0
        %541 = vmatprep.mubr.f32.mxu0 0.0
        %542 = vmatmul.mubr.f32.gmra.mrb[0].mxu0 %v470
        %v543 = vpop.f32.mrb[0].mxu0
        %v544 = vadd.f32 %v463, %v543
        %v545 = vpop.f32.mrb[0].mxu0
        %546 = vdwg.mxu0
        %s547 = scalar_lea.vmem %s3, 96
        %v548 = vld [vmem:[%s547] sm:$0xff]
        %v549 = vld [vmem:[%s547 + $0x8] sm:$0xf]
        %550 = vrot.lane.b32.xlu0 %v358, 96
        %v551 = vpop.permute.xlu0 %550
        %552 = vrot.lane.b32.xlu0 %v362, 96
        %v553 = vpop.permute.xlu0 %552
        %554 = vrot.lane.b32.xlu0 %v359, 96
        %v555 = vpop.permute.xlu0 %554
        %556 = vrot.lane.b32.xlu0 %v363, 96
        %v557 = vpop.permute.xlu0 %556
        %vm558 = vcmask 785408
        %v559 = vsel %vm558, %v551, %v553
        %v560 = vsel %vm558, %v555, %v557
        %v564 = vsel %vm384, %v548, 0
        %v567 = vsel %vm384, %v549, 0
        %569 = vmatprep.subr.mxu0 0.0
        %570 = vmatpush1.msra.mxu0 %v559
        %571 = vmatprep.subr.mxu0 0.0
        %572 = vmatpush1.msra.mxu0 %v560
        %573 = vmatprep.subr.mxu0 0.0
        %574 = vmatpush1.msra.mxu0 0.0
        %575 = vmatprep.subr.mxu0 0.0
        %576 = vmatpush1.msra.mxu0 0.0
        %577 = vmatprep.subr.mxu0 0.0
        %578 = vmatpush1.msra.mxu0 0.0
        %579 = vmatprep.subr.mxu0 0.0
        %580 = vmatpush1.msra.mxu0 0.0
        %581 = vmatprep.subr.mxu0 0.0
        %582 = vmatpush1.msra.mxu0 0.0
        %583 = vmatprep.subr.mxu0 0.0
        %584 = vmatpush1.msra.mxu0 0.0
        %585 = vmatprep.subr.mxu0 0.0
        %586 = vmatpush1.msra.mxu0 0.0
        %587 = vmatprep.subr.mxu0 0.0
        %588 = vmatpush1.msra.mxu0 0.0
        %589 = vmatprep.subr.mxu0 0.0
        %590 = vmatpush1.msra.mxu0 0.0
        %591 = vmatprep.subr.mxu0 0.0
        %592 = vmatpush1.msra.mxu0 0.0
        %593 = vmatprep.subr.mxu0 0.0
        %594 = vmatpush1.msra.mxu0 0.0
        %595 = vmatprep.subr.mxu0 0.0
        %596 = vmatpush1.msra.mxu0 0.0
        %597 = vmatprep.subr.mxu0 0.0
        %598 = vmatpush1.msra.mxu0 0.0
        %599 = vmatprep.subr.mxu0 0.0
        %600 = vmatpush1.msra.mxu0 0.0
        %601 = vmatprep.subr.mxu0 0.0
        %602 = vmatpush1.msra.mxu0 0.0
        %603 = vmatprep.subr.mxu0 0.0
        %604 = vmatpush1.msra.mxu0 0.0
        %605 = vmatprep.subr.mxu0 0.0
        %606 = vmatpush1.msra.mxu0 0.0
        %607 = vmatprep.subr.mxu0 0.0
        %608 = vmatpush1.msra.mxu0 0.0
        %609 = vmatprep.subr.mxu0 0.0
        %610 = vmatpush1.msra.mxu0 0.0
        %611 = vmatprep.subr.mxu0 0.0
        %612 = vmatpush1.msra.mxu0 0.0
        %613 = vmatprep.subr.mxu0 0.0
        %614 = vmatpush1.msra.mxu0 0.0
        %615 = vmatprep.subr.mxu0 0.0
        %616 = vmatpush1.msra.mxu0 0.0
        %617 = vmatprep.subr.mxu0 0.0
        %618 = vmatpush1.msra.mxu0 0.0
        %619 = vmatprep.subr.mxu0 0.0
        %620 = vmatpush1.msra.mxu0 0.0
        %621 = vmatprep.subr.mxu0 0.0
        %622 = vmatpush1.msra.mxu0 0.0
        %623 = vmatprep.subr.mxu0 0.0
        %624 = vmatpush1.msra.mxu0 0.0
        %625 = vmatprep.subr.mxu0 0.0
        %626 = vmatpush1.msra.mxu0 0.0
        %627 = vmatprep.subr.mxu0 0.0
        %628 = vmatpush1.msra.mxu0 0.0
        %629 = vmatprep.subr.mxu0 0.0
        %630 = vmatpush1.msra.mxu0 0.0
        %631 = vmatprep.subr.mxu0 0.0
        %632 = vmatpush1.msra.mxu0 0.0
        %633 = vmatprep.mubr.f32.mxu0 0.0
        %634 = vmatmul.mubr.f32.gmra.mrb[0].mxu0 %v564
        %v635 = vpop.f32.mrb[0].mxu0
        %v636 = vadd.f32 0.0, %v635
        %v637 = vpop.f32.mrb[0].mxu0
        %638 = vmatprep.mubr.f32.mxu0 0.0
        %639 = vmatmul.mubr.f32.gmra.mrb[0].mxu0 %v567
        %v640 = vpop.f32.mrb[0].mxu0
        %v641 = vadd.f32 0.0, %v640
        %v642 = vpop.f32.mrb[0].mxu0
        %643 = vdwg.mxu0
        %v644 = vadd.f32 %v539, %v636
        %v645 = vadd.f32 %v544, %v641
        %s646 = scalar_lea.vmem %s3, 16
        %v647 = vld [vmem:[%s646] sm:$0xff]
        %v648 = vld [vmem:[%s646 + $0x8] sm:$0xf]
        %s649 = scalar_lea.vmem %s3, 64
        %v650 = vld [vmem:[%s649] sm:$0xff]
        %v651 = vld [vmem:[%s649 + $0x8] sm:$0xf]
        %652 = vrot.lane.b32.xlu0 %v358, 111
        %v653 = vpop.permute.xlu0 %652
        %654 = vrot.lane.b32.xlu0 %v362, 111
        %v655 = vpop.permute.xlu0 %654
        %656 = vrot.lane.b32.xlu0 %v359, 111
        %v657 = vpop.permute.xlu0 %656
        %658 = vrot.lane.b32.xlu0 %v363, 111
        %v659 = vpop.permute.xlu0 %658
        %vm660 = vcmask 908288
        %v661 = vsel %vm660, %v653, %v655
        %v662 = vsel %vm660, %v657, %v659
        %v666 = vsel %vm384, %v650, 0
        %v669 = vsel %vm384, %v651, 0
        %671 = vmatprep.subr.mxu0 0.0
        %672 = vmatpush1.msra.mxu0 %v661
        %673 = vmatprep.subr.mxu0 0.0
        %674 = vmatpush1.msra.mxu0 %v662
        %675 = vmatprep.subr.mxu0 0.0
        %676 = vmatpush1.msra.mxu0 0.0
        %677 = vmatprep.subr.mxu0 0.0
        %678 = vmatpush1.msra.mxu0 0.0
        %679 = vmatprep.subr.mxu0 0.0
        %680 = vmatpush1.msra.mxu0 0.0
        %681 = vmatprep.subr.mxu0 0.0
        %682 = vmatpush1.msra.mxu0 0.0
        %683 = vmatprep.subr.mxu0 0.0
        %684 = vmatpush1.msra.mxu0 0.0
        %685 = vmatprep.subr.mxu0 0.0
        %686 = vmatpush1.msra.mxu0 0.0
        %687 = vmatprep.subr.mxu0 0.0
        %688 = vmatpush1.msra.mxu0 0.0
        %689 = vmatprep.subr.mxu0 0.0
        %690 = vmatpush1.msra.mxu0 0.0
        %691 = vmatprep.subr.mxu0 0.0
        %692 = vmatpush1.msra.mxu0 0.0
        %693 = vmatprep.subr.mxu0 0.0
        %694 = vmatpush1.msra.mxu0 0.0
        %695 = vmatprep.subr.mxu0 0.0
        %696 = vmatpush1.msra.mxu0 0.0
        %697 = vmatprep.subr.mxu0 0.0
        %698 = vmatpush1.msra.mxu0 0.0
        %699 = vmatprep.subr.mxu0 0.0
        %700 = vmatpush1.msra.mxu0 0.0
        %701 = vmatprep.subr.mxu0 0.0
        %702 = vmatpush1.msra.mxu0 0.0
        %703 = vmatprep.subr.mxu0 0.0
        %704 = vmatpush1.msra.mxu0 0.0
        %705 = vmatprep.subr.mxu0 0.0
        %706 = vmatpush1.msra.mxu0 0.0
        %707 = vmatprep.subr.mxu0 0.0
        %708 = vmatpush1.msra.mxu0 0.0
        %709 = vmatprep.subr.mxu0 0.0
        %710 = vmatpush1.msra.mxu0 0.0
        %711 = vmatprep.subr.mxu0 0.0
        %712 = vmatpush1.msra.mxu0 0.0
        %713 = vmatprep.subr.mxu0 0.0
        %714 = vmatpush1.msra.mxu0 0.0
        %715 = vmatprep.subr.mxu0 0.0
        %716 = vmatpush1.msra.mxu0 0.0
        %717 = vmatprep.subr.mxu0 0.0
        %718 = vmatpush1.msra.mxu0 0.0
        %719 = vmatprep.subr.mxu0 0.0
        %720 = vmatpush1.msra.mxu0 0.0
        %721 = vmatprep.subr.mxu0 0.0
        %722 = vmatpush1.msra.mxu0 0.0
        %723 = vmatprep.subr.mxu0 0.0
        %724 = vmatpush1.msra.mxu0 0.0
        %725 = vmatprep.subr.mxu0 0.0
        %726 = vmatpush1.msra.mxu0 0.0
        %727 = vmatprep.subr.mxu0 0.0
        %728 = vmatpush1.msra.mxu0 0.0
        %729 = vmatprep.subr.mxu0 0.0
        %730 = vmatpush1.msra.mxu0 0.0
        %731 = vmatprep.subr.mxu0 0.0
        %732 = vmatpush1.msra.mxu0 0.0
        %733 = vmatprep.subr.mxu0 0.0
        %734 = vmatpush1.msra.mxu0 0.0
        %735 = vmatprep.mubr.f32.mxu0 0.0
        %736 = vmatmul.mubr.f32.gmra.mrb[0].mxu0 %v666
        %v737 = vpop.f32.mrb[0].mxu0
        %v738 = vadd.f32 0.0, %v737
        %v739 = vpop.f32.mrb[0].mxu0
        %740 = vmatprep.mubr.f32.mxu0 0.0
        %741 = vmatmul.mubr.f32.gmra.mrb[0].mxu0 %v669
        %v742 = vpop.f32.mrb[0].mxu0
        %v743 = vadd.f32 0.0, %v742
        %v744 = vpop.f32.mrb[0].mxu0
        %745 = vdwg.mxu0
        %746 = vrot.lane.b32.xlu0 %v358, 127
        %v747 = vpop.permute.xlu0 %746
        %748 = vrot.lane.b32.xlu0 %v362, 127
        %v749 = vpop.permute.xlu0 %748
        %750 = vrot.lane.b32.xlu0 %v359, 127
        %v751 = vpop.permute.xlu0 %750
        %752 = vrot.lane.b32.xlu0 %v363, 127
        %v753 = vpop.permute.xlu0 %752
        %vm754 = vcmask 1039360
        %v755 = vsel %vm754, %v747, %v749
        %v756 = vsel %vm754, %v751, %v753
        %v760 = vsel %vm384, %v647, 0
        %v763 = vsel %vm384, %v648, 0
        %765 = vmatprep.subr.mxu0 0.0
        %766 = vmatpush1.msra.mxu0 %v755
        %767 = vmatprep.subr.mxu0 0.0
        %768 = vmatpush1.msra.mxu0 %v756
        %769 = vmatprep.subr.mxu0 0.0
        %770 = vmatpush1.msra.mxu0 0.0
        %771 = vmatprep.subr.mxu0 0.0
        %772 = vmatpush1.msra.mxu0 0.0
        %773 = vmatprep.subr.mxu0 0.0
        %774 = vmatpush1.msra.mxu0 0.0
        %775 = vmatprep.subr.mxu0 0.0
        %776 = vmatpush1.msra.mxu0 0.0
        %777 = vmatprep.subr.mxu0 0.0
        %778 = vmatpush1.msra.mxu0 0.0
        %779 = vmatprep.subr.mxu0 0.0
        %780 = vmatpush1.msra.mxu0 0.0
        %781 = vmatprep.subr.mxu0 0.0
        %782 = vmatpush1.msra.mxu0 0.0
        %783 = vmatprep.subr.mxu0 0.0
        %784 = vmatpush1.msra.mxu0 0.0
        %785 = vmatprep.subr.mxu0 0.0
        %786 = vmatpush1.msra.mxu0 0.0
        %787 = vmatprep.subr.mxu0 0.0
        %788 = vmatpush1.msra.mxu0 0.0
        %789 = vmatprep.subr.mxu0 0.0
        %790 = vmatpush1.msra.mxu0 0.0
        %791 = vmatprep.subr.mxu0 0.0
        %792 = vmatpush1.msra.mxu0 0.0
        %793 = vmatprep.subr.mxu0 0.0
        %794 = vmatpush1.msra.mxu0 0.0
        %795 = vmatprep.subr.mxu0 0.0
        %796 = vmatpush1.msra.mxu0 0.0
        %797 = vmatprep.subr.mxu0 0.0
        %798 = vmatpush1.msra.mxu0 0.0
        %799 = vmatprep.subr.mxu0 0.0
        %800 = vmatpush1.msra.mxu0 0.0
        %801 = vmatprep.subr.mxu0 0.0
        %802 = vmatpush1.msra.mxu0 0.0
        %803 = vmatprep.subr.mxu0 0.0
        %804 = vmatpush1.msra.mxu0 0.0
        %805 = vmatprep.subr.mxu0 0.0
        %806 = vmatpush1.msra.mxu0 0.0
        %807 = vmatprep.subr.mxu0 0.0
        %808 = vmatpush1.msra.mxu0 0.0
        %809 = vmatprep.subr.mxu0 0.0
        %810 = vmatpush1.msra.mxu0 0.0
        %811 = vmatprep.subr.mxu0 0.0
        %812 = vmatpush1.msra.mxu0 0.0
        %813 = vmatprep.subr.mxu0 0.0
        %814 = vmatpush1.msra.mxu0 0.0
        %815 = vmatprep.subr.mxu0 0.0
        %816 = vmatpush1.msra.mxu0 0.0
        %817 = vmatprep.subr.mxu0 0.0
        %818 = vmatpush1.msra.mxu0 0.0
        %819 = vmatprep.subr.mxu0 0.0
        %820 = vmatpush1.msra.mxu0 0.0
        %821 = vmatprep.subr.mxu0 0.0
        %822 = vmatpush1.msra.mxu0 0.0
        %823 = vmatprep.subr.mxu0 0.0
        %824 = vmatpush1.msra.mxu0 0.0
        %825 = vmatprep.subr.mxu0 0.0
        %826 = vmatpush1.msra.mxu0 0.0
        %827 = vmatprep.subr.mxu0 0.0
        %828 = vmatpush1.msra.mxu0 0.0
        %829 = vmatprep.mubr.f32.mxu0 0.0
        %830 = vmatmul.mubr.f32.gmra.mrb[0].mxu0 %v760
        %v831 = vpop.f32.mrb[0].mxu0
        %v832 = vadd.f32 %v738, %v831
        %v833 = vpop.f32.mrb[0].mxu0
        %834 = vmatprep.mubr.f32.mxu0 0.0
        %835 = vmatmul.mubr.f32.gmra.mrb[0].mxu0 %v763
        %v836 = vpop.f32.mrb[0].mxu0
        %v837 = vadd.f32 %v743, %v836
        %v838 = vpop.f32.mrb[0].mxu0
        %839 = vdwg.mxu0
        %s840 = scalar_lea.vmem %s3, 112
        %v841 = vld [vmem:[%s840] sm:$0xff]
        %v842 = vld [vmem:[%s840 + $0x8] sm:$0xf]
        %843 = vrot.lane.b32.xlu0 %v358, 95
        %v844 = vpop.permute.xlu0 %843
        %845 = vrot.lane.b32.xlu0 %v362, 95
        %v846 = vpop.permute.xlu0 %845
        %847 = vrot.lane.b32.xlu0 %v359, 95
        %v848 = vpop.permute.xlu0 %847
        %849 = vrot.lane.b32.xlu0 %v363, 95
        %v850 = vpop.permute.xlu0 %849
        %vm851 = vcmask 777216
        %v852 = vsel %vm851, %v844, %v846
        %v853 = vsel %vm851, %v848, %v850
        %v857 = vsel %vm384, %v841, 0
        %v860 = vsel %vm384, %v842, 0
        %862 = vmatprep.subr.mxu0 0.0
        %863 = vmatpush1.msra.mxu0 %v852
        %864 = vmatprep.subr.mxu0 0.0
        %865 = vmatpush1.msra.mxu0 %v853
        %866 = vmatprep.subr.mxu0 0.0
        %867 = vmatpush1.msra.mxu0 0.0
        %868 = vmatprep.subr.mxu0 0.0
        %869 = vmatpush1.msra.mxu0 0.0
        %870 = vmatprep.subr.mxu0 0.0
        %871 = vmatpush1.msra.mxu0 0.0
        %872 = vmatprep.subr.mxu0 0.0
        %873 = vmatpush1.msra.mxu0 0.0
        %874 = vmatprep.subr.mxu0 0.0
        %875 = vmatpush1.msra.mxu0 0.0
        %876 = vmatprep.subr.mxu0 0.0
        %877 = vmatpush1.msra.mxu0 0.0
        %878 = vmatprep.subr.mxu0 0.0
        %879 = vmatpush1.msra.mxu0 0.0
        %880 = vmatprep.subr.mxu0 0.0
        %881 = vmatpush1.msra.mxu0 0.0
        %882 = vmatprep.subr.mxu0 0.0
        %883 = vmatpush1.msra.mxu0 0.0
        %884 = vmatprep.subr.mxu0 0.0
        %885 = vmatpush1.msra.mxu0 0.0
        %886 = vmatprep.subr.mxu0 0.0
        %887 = vmatpush1.msra.mxu0 0.0
        %888 = vmatprep.subr.mxu0 0.0
        %889 = vmatpush1.msra.mxu0 0.0
        %890 = vmatprep.subr.mxu0 0.0
        %891 = vmatpush1.msra.mxu0 0.0
        %892 = vmatprep.subr.mxu0 0.0
        %893 = vmatpush1.msra.mxu0 0.0
        %894 = vmatprep.subr.mxu0 0.0
        %895 = vmatpush1.msra.mxu0 0.0
        %896 = vmatprep.subr.mxu0 0.0
        %897 = vmatpush1.msra.mxu0 0.0
        %898 = vmatprep.subr.mxu0 0.0
        %899 = vmatpush1.msra.mxu0 0.0
        %900 = vmatprep.subr.mxu0 0.0
        %901 = vmatpush1.msra.mxu0 0.0
        %902 = vmatprep.subr.mxu0 0.0
        %903 = vmatpush1.msra.mxu0 0.0
        %904 = vmatprep.subr.mxu0 0.0
        %905 = vmatpush1.msra.mxu0 0.0
        %906 = vmatprep.subr.mxu0 0.0
        %907 = vmatpush1.msra.mxu0 0.0
        %908 = vmatprep.subr.mxu0 0.0
        %909 = vmatpush1.msra.mxu0 0.0
        %910 = vmatprep.subr.mxu0 0.0
        %911 = vmatpush1.msra.mxu0 0.0
        %912 = vmatprep.subr.mxu0 0.0
        %913 = vmatpush1.msra.mxu0 0.0
        %914 = vmatprep.subr.mxu0 0.0
        %915 = vmatpush1.msra.mxu0 0.0
        %916 = vmatprep.subr.mxu0 0.0
        %917 = vmatpush1.msra.mxu0 0.0
        %918 = vmatprep.subr.mxu0 0.0
        %919 = vmatpush1.msra.mxu0 0.0
        %920 = vmatprep.subr.mxu0 0.0
        %921 = vmatpush1.msra.mxu0 0.0
        %922 = vmatprep.subr.mxu0 0.0
        %923 = vmatpush1.msra.mxu0 0.0
        %924 = vmatprep.subr.mxu0 0.0
        %925 = vmatpush1.msra.mxu0 0.0
        %926 = vmatprep.mubr.f32.mxu0 0.0
        %927 = vmatmul.mubr.f32.gmra.mrb[0].mxu0 %v857
        %v928 = vpop.f32.mrb[0].mxu0
        %v929 = vadd.f32 0.0, %v928
        %v930 = vpop.f32.mrb[0].mxu0
        %931 = vmatprep.mubr.f32.mxu0 0.0
        %932 = vmatmul.mubr.f32.gmra.mrb[0].mxu0 %v860
        %v933 = vpop.f32.mrb[0].mxu0
        %v934 = vadd.f32 0.0, %v933
        %v935 = vpop.f32.mrb[0].mxu0
        %936 = vdwg.mxu0
        %v937 = vadd.f32 %v832, %v929
        %v938 = vadd.f32 %v837, %v934
        %s939 = scalar_lea.vmem %s3, 32
        %v940 = vld [vmem:[%s939] sm:$0xff]
        %v941 = vld [vmem:[%s939 + $0x8] sm:$0xf]
        %s942 = scalar_lea.vmem %s3, 80
        %v943 = vld [vmem:[%s942] sm:$0xff]
        %v944 = vld [vmem:[%s942 + $0x8] sm:$0xf]
        %945 = vrot.lane.b32.xlu0 %v358, 110
        %v946 = vpop.permute.xlu0 %945
        %947 = vrot.lane.b32.xlu0 %v362, 110
        %v948 = vpop.permute.xlu0 %947
        %949 = vrot.lane.b32.xlu0 %v359, 110
        %v950 = vpop.permute.xlu0 %949
        %951 = vrot.lane.b32.xlu0 %v363, 110
        %v952 = vpop.permute.xlu0 %951
        %vm953 = vcmask 900096
        %v954 = vsel %vm953, %v946, %v948
        %v955 = vsel %vm953, %v950, %v952
        %v959 = vsel %vm384, %v943, 0
        %v962 = vsel %vm384, %v944, 0
        %964 = vmatprep.subr.mxu0 0.0
        %965 = vmatpush1.msra.mxu0 %v954
        %966 = vmatprep.subr.mxu0 0.0
        %967 = vmatpush1.msra.mxu0 %v955
        %968 = vmatprep.subr.mxu0 0.0
        %969 = vmatpush1.msra.mxu0 0.0
        %970 = vmatprep.subr.mxu0 0.0
        %971 = vmatpush1.msra.mxu0 0.0
        %972 = vmatprep.subr.mxu0 0.0
        %973 = vmatpush1.msra.mxu0 0.0
        %974 = vmatprep.subr.mxu0 0.0
        %975 = vmatpush1.msra.mxu0 0.0
        %976 = vmatprep.subr.mxu0 0.0
        %977 = vmatpush1.msra.mxu0 0.0
        %978 = vmatprep.subr.mxu0 0.0
        %979 = vmatpush1.msra.mxu0 0.0
        %980 = vmatprep.subr.mxu0 0.0
        %981 = vmatpush1.msra.mxu0 0.0
        %982 = vmatprep.subr.mxu0 0.0
        %983 = vmatpush1.msra.mxu0 0.0
        %984 = vmatprep.subr.mxu0 0.0
        %985 = vmatpush1.msra.mxu0 0.0
        %986 = vmatprep.subr.mxu0 0.0
        %987 = vmatpush1.msra.mxu0 0.0
        %988 = vmatprep.subr.mxu0 0.0
        %989 = vmatpush1.msra.mxu0 0.0
        %990 = vmatprep.subr.mxu0 0.0
        %991 = vmatpush1.msra.mxu0 0.0
        %992 = vmatprep.subr.mxu0 0.0
        %993 = vmatpush1.msra.mxu0 0.0
        %994 = vmatprep.subr.mxu0 0.0
        %995 = vmatpush1.msra.mxu0 0.0
        %996 = vmatprep.subr.mxu0 0.0
        %997 = vmatpush1.msra.mxu0 0.0
        %998 = vmatprep.subr.mxu0 0.0
        %999 = vmatpush1.msra.mxu0 0.0
        %1000 = vmatprep.subr.mxu0 0.0
        %1001 = vmatpush1.msra.mxu0 0.0
        %1002 = vmatprep.subr.mxu0 0.0
        %1003 = vmatpush1.msra.mxu0 0.0
        %1004 = vmatprep.subr.mxu0 0.0
        %1005 = vmatpush1.msra.mxu0 0.0
        %1006 = vmatprep.subr.mxu0 0.0
        %1007 = vmatpush1.msra.mxu0 0.0
        %1008 = vmatprep.subr.mxu0 0.0
        %1009 = vmatpush1.msra.mxu0 0.0
        %1010 = vmatprep.subr.mxu0 0.0
        %1011 = vmatpush1.msra.mxu0 0.0
        %1012 = vmatprep.subr.mxu0 0.0
        %1013 = vmatpush1.msra.mxu0 0.0
        %1014 = vmatprep.subr.mxu0 0.0
        %1015 = vmatpush1.msra.mxu0 0.0
        %1016 = vmatprep.subr.mxu0 0.0
        %1017 = vmatpush1.msra.mxu0 0.0
        %1018 = vmatprep.subr.mxu0 0.0
        %1019 = vmatpush1.msra.mxu0 0.0
        %1020 = vmatprep.subr.mxu0 0.0
        %1021 = vmatpush1.msra.mxu0 0.0
        %1022 = vmatprep.subr.mxu0 0.0
        %1023 = vmatpush1.msra.mxu0 0.0
        %1024 = vmatprep.subr.mxu0 0.0
        %1025 = vmatpush1.msra.mxu0 0.0
        %1026 = vmatprep.subr.mxu0 0.0
        %1027 = vmatpush1.msra.mxu0 0.0
        %1028 = vmatprep.mubr.f32.mxu0 0.0
        %1029 = vmatmul.mubr.f32.gmra.mrb[0].mxu0 %v959
        %v1030 = vpop.f32.mrb[0].mxu0
        %v1031 = vadd.f32 0.0, %v1030
        %v1032 = vpop.f32.mrb[0].mxu0
        %1033 = vmatprep.mubr.f32.mxu0 0.0
        %1034 = vmatmul.mubr.f32.gmra.mrb[0].mxu0 %v962
        %v1035 = vpop.f32.mrb[0].mxu0
        %v1036 = vadd.f32 0.0, %v1035
        %v1037 = vpop.f32.mrb[0].mxu0
        %1038 = vdwg.mxu0
        %1039 = vrot.lane.b32.xlu0 %v358, 126
        %v1040 = vpop.permute.xlu0 %1039
        %1041 = vrot.lane.b32.xlu0 %v362, 126
        %v1042 = vpop.permute.xlu0 %1041
        %1043 = vrot.lane.b32.xlu0 %v359, 126
        %v1044 = vpop.permute.xlu0 %1043
        %1045 = vrot.lane.b32.xlu0 %v363, 126
        %v1046 = vpop.permute.xlu0 %1045
        %vm1047 = vcmask 1031168
        %v1048 = vsel %vm1047, %v1040, %v1042
        %v1049 = vsel %vm1047, %v1044, %v1046
        %v1053 = vsel %vm384, %v940, 0
        %v1056 = vsel %vm384, %v941, 0
        %1058 = vmatprep.subr.mxu0 0.0
        %1059 = vmatpush1.msra.mxu0 %v1048
        %1060 = vmatprep.subr.mxu0 0.0
        %1061 = vmatpush1.msra.mxu0 %v1049
        %1062 = vmatprep.subr.mxu0 0.0
        %1063 = vmatpush1.msra.mxu0 0.0
        %1064 = vmatprep.subr.mxu0 0.0
        %1065 = vmatpush1.msra.mxu0 0.0
        %1066 = vmatprep.subr.mxu0 0.0
        %1067 = vmatpush1.msra.mxu0 0.0
        %1068 = vmatprep.subr.mxu0 0.0
        %1069 = vmatpush1.msra.mxu0 0.0
        %1070 = vmatprep.subr.mxu0 0.0
        %1071 = vmatpush1.msra.mxu0 0.0
        %1072 = vmatprep.subr.mxu0 0.0
        %1073 = vmatpush1.msra.mxu0 0.0
        %1074 = vmatprep.subr.mxu0 0.0
        %1075 = vmatpush1.msra.mxu0 0.0
        %1076 = vmatprep.subr.mxu0 0.0
        %1077 = vmatpush1.msra.mxu0 0.0
        %1078 = vmatprep.subr.mxu0 0.0
        %1079 = vmatpush1.msra.mxu0 0.0
        %1080 = vmatprep.subr.mxu0 0.0
        %1081 = vmatpush1.msra.mxu0 0.0
        %1082 = vmatprep.subr.mxu0 0.0
        %1083 = vmatpush1.msra.mxu0 0.0
        %1084 = vmatprep.subr.mxu0 0.0
        %1085 = vmatpush1.msra.mxu0 0.0
        %1086 = vmatprep.subr.mxu0 0.0
        %1087 = vmatpush1.msra.mxu0 0.0
        %1088 = vmatprep.subr.mxu0 0.0
        %1089 = vmatpush1.msra.mxu0 0.0
        %1090 = vmatprep.subr.mxu0 0.0
        %1091 = vmatpush1.msra.mxu0 0.0
        %1092 = vmatprep.subr.mxu0 0.0
        %1093 = vmatpush1.msra.mxu0 0.0
        %1094 = vmatprep.subr.mxu0 0.0
        %1095 = vmatpush1.msra.mxu0 0.0
        %1096 = vmatprep.subr.mxu0 0.0
        %1097 = vmatpush1.msra.mxu0 0.0
        %1098 = vmatprep.subr.mxu0 0.0
        %1099 = vmatpush1.msra.mxu0 0.0
        %1100 = vmatprep.subr.mxu0 0.0
        %1101 = vmatpush1.msra.mxu0 0.0
        %1102 = vmatprep.subr.mxu0 0.0
        %1103 = vmatpush1.msra.mxu0 0.0
        %1104 = vmatprep.subr.mxu0 0.0
        %1105 = vmatpush1.msra.mxu0 0.0
        %1106 = vmatprep.subr.mxu0 0.0
        %1107 = vmatpush1.msra.mxu0 0.0
        %1108 = vmatprep.subr.mxu0 0.0
        %1109 = vmatpush1.msra.mxu0 0.0
        %1110 = vmatprep.subr.mxu0 0.0
        %1111 = vmatpush1.msra.mxu0 0.0
        %1112 = vmatprep.subr.mxu0 0.0
        %1113 = vmatpush1.msra.mxu0 0.0
        %1114 = vmatprep.subr.mxu0 0.0
        %1115 = vmatpush1.msra.mxu0 0.0
        %1116 = vmatprep.subr.mxu0 0.0
        %1117 = vmatpush1.msra.mxu0 0.0
        %1118 = vmatprep.subr.mxu0 0.0
        %1119 = vmatpush1.msra.mxu0 0.0
        %1120 = vmatprep.subr.mxu0 0.0
        %1121 = vmatpush1.msra.mxu0 0.0
        %1122 = vmatprep.mubr.f32.mxu0 0.0
        %1123 = vmatmul.mubr.f32.gmra.mrb[0].mxu0 %v1053
        %v1124 = vpop.f32.mrb[0].mxu0
        %v1125 = vadd.f32 %v1031, %v1124
        %v1126 = vpop.f32.mrb[0].mxu0
        %1127 = vmatprep.mubr.f32.mxu0 0.0
        %1128 = vmatmul.mubr.f32.gmra.mrb[0].mxu0 %v1056
        %v1129 = vpop.f32.mrb[0].mxu0
        %v1130 = vadd.f32 %v1036, %v1129
        %v1131 = vpop.f32.mrb[0].mxu0
        %1132 = vdwg.mxu0
        %s1133 = scalar_lea.vmem %s3, 128
        %v1134 = vld [vmem:[%s1133] sm:$0xff]
        %v1135 = vld [vmem:[%s1133 + $0x8] sm:$0xf]
        %1136 = vrot.lane.b32.xlu0 %v358, 94
        %v1137 = vpop.permute.xlu0 %1136
        %1138 = vrot.lane.b32.xlu0 %v362, 94
        %v1139 = vpop.permute.xlu0 %1138
        %1140 = vrot.lane.b32.xlu0 %v359, 94
        %v1141 = vpop.permute.xlu0 %1140
        %1142 = vrot.lane.b32.xlu0 %v363, 94
        %v1143 = vpop.permute.xlu0 %1142
        %vm1144 = vcmask 769024
        %v1145 = vsel %vm1144, %v1137, %v1139
        %v1146 = vsel %vm1144, %v1141, %v1143
        %v1150 = vsel %vm384, %v1134, 0
        %v1153 = vsel %vm384, %v1135, 0
        %1155 = vmatprep.subr.mxu0 0.0
        %1156 = vmatpush1.msra.mxu0 %v1145
        %1157 = vmatprep.subr.mxu0 0.0
        %1158 = vmatpush1.msra.mxu0 %v1146
        %1159 = vmatprep.subr.mxu0 0.0
        %1160 = vmatpush1.msra.mxu0 0.0
        %1161 = vmatprep.subr.mxu0 0.0
        %1162 = vmatpush1.msra.mxu0 0.0
        %1163 = vmatprep.subr.mxu0 0.0
        %1164 = vmatpush1.msra.mxu0 0.0
        %1165 = vmatprep.subr.mxu0 0.0
        %1166 = vmatpush1.msra.mxu0 0.0
        %1167 = vmatprep.subr.mxu0 0.0
        %1168 = vmatpush1.msra.mxu0 0.0
        %1169 = vmatprep.subr.mxu0 0.0
        %1170 = vmatpush1.msra.mxu0 0.0
        %1171 = vmatprep.subr.mxu0 0.0
        %1172 = vmatpush1.msra.mxu0 0.0
        %1173 = vmatprep.subr.mxu0 0.0
        %1174 = vmatpush1.msra.mxu0 0.0
        %1175 = vmatprep.subr.mxu0 0.0
        %1176 = vmatpush1.msra.mxu0 0.0
        %1177 = vmatprep.subr.mxu0 0.0
        %1178 = vmatpush1.msra.mxu0 0.0
        %1179 = vmatprep.subr.mxu0 0.0
        %1180 = vmatpush1.msra.mxu0 0.0
        %1181 = vmatprep.subr.mxu0 0.0
        %1182 = vmatpush1.msra.mxu0 0.0
        %1183 = vmatprep.subr.mxu0 0.0
        %1184 = vmatpush1.msra.mxu0 0.0
        %1185 = vmatprep.subr.mxu0 0.0
        %1186 = vmatpush1.msra.mxu0 0.0
        %1187 = vmatprep.subr.mxu0 0.0
        %1188 = vmatpush1.msra.mxu0 0.0
        %1189 = vmatprep.subr.mxu0 0.0
        %1190 = vmatpush1.msra.mxu0 0.0
        %1191 = vmatprep.subr.mxu0 0.0
        %1192 = vmatpush1.msra.mxu0 0.0
        %1193 = vmatprep.subr.mxu0 0.0
        %1194 = vmatpush1.msra.mxu0 0.0
        %1195 = vmatprep.subr.mxu0 0.0
        %1196 = vmatpush1.msra.mxu0 0.0
        %1197 = vmatprep.subr.mxu0 0.0
        %1198 = vmatpush1.msra.mxu0 0.0
        %1199 = vmatprep.subr.mxu0 0.0
        %1200 = vmatpush1.msra.mxu0 0.0
        %1201 = vmatprep.subr.mxu0 0.0
        %1202 = vmatpush1.msra.mxu0 0.0
        %1203 = vmatprep.subr.mxu0 0.0
        %1204 = vmatpush1.msra.mxu0 0.0
        %1205 = vmatprep.subr.mxu0 0.0
        %1206 = vmatpush1.msra.mxu0 0.0
        %1207 = vmatprep.subr.mxu0 0.0
        %1208 = vmatpush1.msra.mxu0 0.0
        %1209 = vmatprep.subr.mxu0 0.0
        %1210 = vmatpush1.msra.mxu0 0.0
        %1211 = vmatprep.subr.mxu0 0.0
        %1212 = vmatpush1.msra.mxu0 0.0
        %1213 = vmatprep.subr.mxu0 0.0
        %1214 = vmatpush1.msra.mxu0 0.0
        %1215 = vmatprep.subr.mxu0 0.0
        %1216 = vmatpush1.msra.mxu0 0.0
        %1217 = vmatprep.subr.mxu0 0.0
        %1218 = vmatpush1.msra.mxu0 0.0
        %1219 = vmatprep.mubr.f32.mxu0 0.0
        %1220 = vmatmul.mubr.f32.gmra.mrb[0].mxu0 %v1150
        %v1221 = vpop.f32.mrb[0].mxu0
        %v1222 = vadd.f32 0.0, %v1221
        %v1223 = vpop.f32.mrb[0].mxu0
        %1224 = vmatprep.mubr.f32.mxu0 0.0
        %1225 = vmatmul.mubr.f32.gmra.mrb[0].mxu0 %v1153
        %v1226 = vpop.f32.mrb[0].mxu0
        %v1227 = vadd.f32 0.0, %v1226
        %v1228 = vpop.f32.mrb[0].mxu0
        %1229 = vdwg.mxu0
        %v1230 = vadd.f32 %v1125, %v1222
        %v1231 = vadd.f32 %v1130, %v1227
        %v1232 = vld [vmem:[%s0] sm:$0x1]
        %v1233 = vlaneseq
        %v1234 = vshrl.u32 %v1233, 7
        %v1235 = vsub.s32 0, %v1234
        %v1236 = vrot.slane %v1232, %v1235
        %v1237 = vmul.f32 %v644, %v1236
        %v1238 = vmul.f32 %v645, %v1236
        %v1239 = vadd.f32 %v937, %v1237
        %v1240 = vadd.f32 %v938, %v1238
        %v1241 = vld [vmem:[%s0 + $0x1] sm:$0x1]
        %v1242 = vlaneseq
        %v1243 = vshrl.u32 %v1242, 7
        %v1244 = vsub.s32 0, %v1243
        %v1245 = vrot.slane %v1241, %v1244
        %v1246 = vmul.f32 %v1230, %v1245
        %v1247 = vmul.f32 %v1231, %v1245
        %v1248 = vadd.f32 %v1239, %v1246
        %v1249 = vadd.f32 %v1240, %v1247
        %v1250 = vld [vmem:[%s4] sm:$0xff]
        %v1251 = vld [vmem:[%s4 + $0x8] sm:$0xf]
        %1253 = vset.pattern.permute.xlu0 0
        %1254 = vperm.xlu0 %1253, %v1250
        %v1255 = vpop.permute.xlu0 %1254
        %1258 = vset.pattern.permute.xlu0 0
        %1259 = vperm.xlu0 %1258, %v1251
        %v1260 = vpop.permute.xlu0 %1259
        %v1262 = vadd.f32 %v1248, %v1255
        %v1263 = vadd.f32 %v1249, %v1260
        %1264 = vst [vmem:[%s299] sm:$0xff] %v1262
        %1265 = vst [vmem:[%s299 + $0x8] sm:$0xf] %v1263
        %s1266 = sand.u32 %s157, 1
        %s1267 = sand.u32 %s157, 1
        %s1268 = smul.addr %s1267, 16
        %s1269 = scalar_lea.vmem [#allocation4], %s1268
        // Predicated region
        $region79: #{upsample_one_step.1} parent=73 // pred_check
          %p1270 = pneg %p167
        $region80: #{upsample_one_step.1} parent=73 // pred_check_branch
          %1272 = sbr.rel (%p1270) target = $region82
        $region81: #{upsample_one_step.1} parent=73 // pred_region
          %s1273 = smul.addr %s20, 4
          %s1274 = sadd.s32 %s21, %s1273
          %s1275 = smul.addr %s1274, 8
          %s1276 = scalar_lea.vmem %s5, %s1275
          // Predicated region
          $region83: #{upsample_one_step.1} parent=81 // pred_check
            _
          $region84: #{upsample_one_step.1} parent=81 // pred_check_branch
            %1278 = sbr.rel (0) target = $region86
          $region85: #{upsample_one_step.1} parent=81 // pred_region
            // Predicated region
            $region87: #{upsample_one_step.1} parent=85 // pred_check
              _
            $region88: #{upsample_one_step.1} parent=85 // pred_check_branch
              %1280 = sbr.rel (0) target = $region90
            $region89: #{upsample_one_step.1} parent=85 // pred_region
              // Predicated region
              $region102: #{upsample_one_step.1} parent=89 // pred_check
                _
              $region103: #{upsample_one_step.1} parent=89 // pred_check_branch
                %1297 = sbr.rel (0) target = $region105
              $region104: #{upsample_one_step.1} parent=89 // pred_region
                loop: start=0, step=1, limit=1
                $region106: #{upsample_one_step.1} parent=104 // loop_pre_header
                  _
                $region107: #{upsample_one_step.1} parent=104 // loop_header
                  %s1299 = sphi 0, %s1303
                  %p1300 = scmp.ge.s32.totalorder %s1299, 1
                  %s1304 = sphi %s1269, %s1269
                  %s1305 = sphi %s1276, %s1276
                $region108: #{upsample_one_step.1} parent=104 // loop_header_branch
                  %1302 = sbr.rel (%p1300) target = $region112
                $region109: #{upsample_one_step.1} parent=104 // loop_body
                  %v1306 = vld [vmem:[%s1304] sm:$0xff]
                  %1307 = vst [vmem:[%s1305] sm:$0xff] %v1306
                  %v1308 = vld [vmem:[%s1304 + $0x8] sm:$0xff]
                  %1309 = vst [vmem:[%s1305 + $0x10] sm:$0xff] %v1308
                $region110: #{upsample_one_step.1} parent=104 // loop_footer
                  %s1303 = sadd.s32 1, %s1299
                $region111: #{upsample_one_step.1} parent=104 // loop_footer_branch
                  %1298 = sbr.rel target = $region107
                $region112: #{upsample_one_step.1} parent=104 // loop_exit
                  _
              $region105: #{upsample_one_step.1} parent=89 // pred_fallthru
                _
              // Predicated region
              $region113: #{upsample_one_step.1} parent=89 // pred_check
                _
              $region114: #{upsample_one_step.1} parent=89 // pred_check_branch
                %1311 = sbr.rel target = $region116
              $region115: #{upsample_one_step.1} parent=89 // pred_region
                _
              $region116: #{upsample_one_step.1} parent=89 // pred_fallthru
                _
            $region90: #{upsample_one_step.1} parent=85 // pred_fallthru
              _
            // Predicated region
            $region91: #{upsample_one_step.1} parent=85 // pred_check
              _
            $region92: #{upsample_one_step.1} parent=85 // pred_check_branch
              %1282 = sbr.rel target = $region94
            $region93: #{upsample_one_step.1} parent=85 // pred_region
              loop: start=0, step=1, limit=1
              $region95: #{upsample_one_step.1} parent=93 // loop_pre_header
                _
              $region96: #{upsample_one_step.1} parent=93 // loop_header
                %s1285 = sphi 0, %s1289
                %p1286 = scmp.ge.s32.totalorder %s1285, 1
                %s1290 = sphi %s1269, %s1269
                %s1291 = sphi %s1276, %s1276
              $region97: #{upsample_one_step.1} parent=93 // loop_header_branch
                %1288 = sbr.rel (%p1286) target = $region101
              $region98: #{upsample_one_step.1} parent=93 // loop_body
                %v1292 = vld [vmem:[%s1290] sm:$0xff]
                %1293 = vst [vmem:[%s1291] sm:$0xff] %v1292
                %v1294 = vld [vmem:[%s1290 + $0x8] sm:$0xff]
                %1295 = vst [vmem:[%s1291 + $0x10] sm:$0xff] %v1294
              $region99: #{upsample_one_step.1} parent=93 // loop_footer
                %s1289 = sadd.s32 1, %s1285
              $region100: #{upsample_one_step.1} parent=93 // loop_footer_branch
                %1284 = sbr.rel target = $region96
              $region101: #{upsample_one_step.1} parent=93 // loop_exit
                _
            $region94: #{upsample_one_step.1} parent=85 // pred_fallthru
              _
          $region86: #{upsample_one_step.1} parent=81 // pred_fallthru
            _
          %1312 = vnop
        $region82: #{upsample_one_step.1} parent=73 // pred_fallthru
          _
      $region74: #{upsample_one_step.1} parent=5 // pred_fallthru
        _
      %p1313 = scmp.le.s32.totalorder 2, %s11
      // Predicated region
      $region117: #{upsample_one_step.1} parent=5 // pred_check
        %p1314 = pneg %p1313
      $region118: #{upsample_one_step.1} parent=5 // pred_check_branch
        %1316 = sbr.rel (%p1314) target = $region120
      $region119: #{upsample_one_step.1} parent=5 // pred_region
        %s1317 = ssub.s32 %s11, 2
        // Predicated region
        $region121: #{upsample_one_step.1} parent=119 // pred_check
          %p1318 = pneg %p173
        $region122: #{upsample_one_step.1} parent=119 // pred_check_branch
          %1320 = sbr.rel (%p1318) target = $region124
        $region123: #{upsample_one_step.1} parent=119 // pred_region
          %s1321 = sand.u32 %s158, 1
          %s1322 = sand.u32 %s158, 1
          %s1323 = smul.addr %s1322, 16
          %s1324 = scalar_lea.vmem [#allocation4], %s1323
        $region124: #{upsample_one_step.1} parent=119 // pred_fallthru
          _
      $region120: #{upsample_one_step.1} parent=5 // pred_fallthru
        _
    $region6: #{upsample_one_step.1} parent=1 // loop_footer
      %s15 = sadd.s32 1, %s11
    $region7: #{upsample_one_step.1} parent=1 // loop_footer_branch
      %10 = sbr.rel target = $region3
    $region8: #{upsample_one_step.1} parent=1 // loop_exit
      _

</llo_original>
